<compile_context>
chip_gen: v5e
topology: v5e:2x2
jax: 0.10.0
libtpu: 0.0.40
codegen_flags: <defaults>
</compile_context>

<pallas_src>
import functools

import jax
import jax.numpy as jnp
from jax.experimental import pallas as pl
from jax.experimental.pallas import tpu as pltpu


# ----------------------------------------------------------------------------
# helpers
# ----------------------------------------------------------------------------
def _round_up(x, m):
    return (x + m - 1) // m * m


def _pad_ch(c):
    """Persistent channel padding: x64 up to 512, x128 above.  Keeps every GEMM
    N dimension either <=512 (single full-width panel) or a lane-dense multiple
    of 128, so no runtime weight pad / output column slice is ever needed."""
    p = _round_up(c, 64)
    if p > 512:
        p = _round_up(c, 128)
    return p


def _pad_axis(a, axis, target):
    pad = target - a.shape[axis]
    if pad == 0:
        return a
    widths = [(0, 0)] * a.ndim
    widths[axis] = (0, pad)
    return jnp.pad(a, widths)


# ----------------------------------------------------------------------------
# generation-aware VMEM budget
# ----------------------------------------------------------------------------
def _detect_vmem():
    cap = None
    try:
        cap = getattr(pltpu.get_tpu_info(), "vmem_capacity_bytes", None)
    except Exception:
        cap = None
    if cap is None:
        cap = 64 * 1024 * 1024                      # assume smallest (v7x-like)
    if cap >= 96 * 1024 * 1024:                     # v4/v5e/v5p/v6e: 128 MiB
        return 56 * 1024 * 1024, 96 * 1024 * 1024
    return 18 * 1024 * 1024, 44 * 1024 * 1024       # v7x: 64 MiB physical


_VMEM_BUDGET, _VMEM_LIMIT = _detect_vmem()

# Fused temporal-conv path is used when the per-frame GEMM has at least this
# many rows (H*W); tiny late-layer frames fall back to the im2col GEMM.
_FUSE_HW_MIN = 64


# ----------------------------------------------------------------------------
# Pallas GEMM kernel:  out = act(A @ B + bias [+ residual])
#   A, B bf16, f32 accumulation, fused bias / residual / SiLU epilogue, single
#   full-K step (no accumulator scratch), weight-stationary over the M sweep.
# ----------------------------------------------------------------------------
def _gemm_bias_act_kernel(a_ref, b_ref, c_ref, *rest, act, has_res):
    if has_res:
        r_ref, o_ref = rest
    else:
        (o_ref,) = rest
    y = jnp.dot(a_ref[...], b_ref[...], preferred_element_type=jnp.float32)
    y = y + c_ref[...]
    if has_res:
        y = y + r_ref[...].astype(jnp.float32)
    if act == "silu":
        y = y * jax.nn.sigmoid(y)
    o_ref[...] = y.astype(o_ref.dtype)


def _pick_tn(N, K):
    """Output-column tile: a single full-width panel when it fits the budget,
    else the largest 128-multiple divisor of N."""
    if N <= 512:
        return N, N
    if 2 * (2 * K * N) <= _VMEM_BUDGET // 2:          # dbl-buffered bf16 panel
        return N, N
    for c in (512, 384, 256, 128):
        if N % c == 0:
            return c, N
    Np = _round_up(N, 128)                            # defensive fallback only
    for c in (512, 384, 256, 128):
        if Np % c == 0:
            return c, Np
    return 128, Np


def _pick_tm(M, K, tn, out_bytes, has_res):
    """Row tile: as large as the VMEM budget allows (<=512); prefer a divisor
    of M so no row padding / output slicing is needed."""
    fixed = 2 * (2 * K * tn) + 2 * 4 * tn             # B (bf16) + bias (f32), x2
    per_row = 2 * (2 * K) + 2 * out_bytes * tn        # A (bf16) + out, x2 buf
    if has_res:
        per_row += 2 * 2 * tn                         # residual (bf16), x2 buf
    avail = max(_VMEM_BUDGET - fixed, 1 << 20)
    max_tm = int(min(512, max(16, avail // per_row)))
    if M <= max_tm:
        tm = _round_up(max(M, 1), 16)
        return tm, tm                                 # single block (maybe padded)
    for c in (512, 256, 128, 64, 32, 16):
        if c <= max_tm and M % c == 0:
            return c, M
    for c in (512, 256, 128, 64, 32, 16):
        if c <= max_tm:
            return c, _round_up(M, c)
    return 16, _round_up(M, 16)


def gemm_bias_act(A, B, bias, act="none", out_dtype=jnp.bfloat16,
                  residual=None):
    """out = act(A @ B + bias [+ residual]).  A:(M,K), B:(K,N), bias:(N,)."""
    M, K = A.shape
    K2, N = B.shape
    assert K == K2 and bias.shape == (N,)

    A = A.astype(jnp.bfloat16)
    B = B.astype(jnp.bfloat16)
    bias = bias.astype(jnp.float32)

    if K % 16:                       # only the stem conv1 (K=147) hits this
        Kp = _round_up(K, 16)
        A = jnp.pad(A, ((0, 0), (0, Kp - K)))
        B = jnp.pad(B, ((0, Kp - K), (0, 0)))
        K = Kp

    tn, Np = _pick_tn(N, K)
    out_bytes = jnp.dtype(out_dtype).itemsize
    tm, Mp = _pick_tm(M, K, tn, out_bytes, residual is not None)

    if Np != N:                      # defensive only: weights are pre-padded
        B = jnp.pad(B, ((0, 0), (0, Np - N)))
        bias = jnp.pad(bias, (0, Np - N))
        if residual is not None:
            residual = jnp.pad(residual, ((0, 0), (0, Np - N)))
    if Mp != M:
        A = jnp.pad(A, ((0, Mp - M), (0, 0)))
        if residual is not None:
            residual = jnp.pad(residual, ((0, Mp - M), (0, 0)))
    bias2 = bias.reshape(1, Np)

    has_res = residual is not None
    in_specs = [
        pl.BlockSpec((tm, K), lambda j, i: (i, 0)),
        pl.BlockSpec((K, tn), lambda j, i: (0, j)),
        pl.BlockSpec((1, tn), lambda j, i: (0, j)),
    ]
    inputs = [A, B, bias2]
    if has_res:
        in_specs.append(pl.BlockSpec((tm, tn), lambda j, i: (i, j)))
        inputs.append(residual.astype(jnp.bfloat16))

    grid = (Np // tn, Mp // tm)      # N outer, M inner -> weight panel resident
    out = pl.pallas_call(
        functools.partial(_gemm_bias_act_kernel, act=act, has_res=has_res),
        out_shape=jax.ShapeDtypeStruct((Mp, Np), out_dtype),
        grid_spec=pltpu.PrefetchScalarGridSpec(
            num_scalar_prefetch=0,
            grid=grid,
            in_specs=in_specs,
            out_specs=pl.BlockSpec((tm, tn), lambda j, i: (i, j)),
        ),
        compiler_params=pltpu.CompilerParams(
            dimension_semantics=("parallel", "parallel"),
            vmem_limit_bytes=_VMEM_LIMIT),
    )(*inputs)
    if Mp != M or Np != N:
        out = out[:M, :N]
    return out


# ----------------------------------------------------------------------------
# Fused temporal (k,1,1) convolution: tap axis in the grid, f32 accumulator,
# fused bias / residual / SiLU epilogue.  No im2col matrix in HBM.
# ----------------------------------------------------------------------------
def _tconv_kernel(x_ref, w_ref, b_ref, *rest, act, nt, has_res):
    if has_res:
        r_ref, o_ref, acc_ref = rest
    else:
        o_ref, acc_ref = rest
    t = pl.program_id(3)

    @pl.when(t == 0)
    def _():
        acc_ref[...] = jnp.zeros_like(acc_ref)

    acc_ref[...] += jnp.dot(x_ref[0], w_ref[0],
                            preferred_element_type=jnp.float32)

    @pl.when(t == nt - 1)
    def _():
        y = acc_ref[...] + b_ref[...]
        if has_res:
            y = y + r_ref[0].astype(jnp.float32)
        if act == "silu":
            y = y * jax.nn.sigmoid(y)
        o_ref[0] = y.astype(o_ref.dtype)


def temporal_conv_fused(x, w, bias, st, pt, act, residual=None,
                        out_dtype=jnp.bfloat16):
    """x: [N,D,H,W,Cin] bf16, w: [kt,1,1,Cin,Cout] bf16 (BN folded, padded),
    bias: [Cout] f32.  A temporal tap is a D-shift, so each grid step is a
    per-frame GEMM whose A block is addressed directly in the padded input."""
    N, D, H, W, Cin = x.shape
    kt, kh, kw, wcin, Cout = w.shape
    assert kh == 1 and kw == 1 and wcin == Cin
    Dp = D + 2 * pt
    Do = (D + 2 * pt - kt) // st + 1
    HW = H * W

    xr = x.reshape(N, D, HW, Cin)
    if pt:
        xr = jnp.pad(xr, ((0, 0), (pt, pt), (0, 0), (0, 0)))
    xr = xr.reshape(N * Dp, HW, Cin).astype(jnp.bfloat16)
    wr = w.reshape(kt, Cin, Cout).astype(jnp.bfloat16)
    br = bias.astype(jnp.float32).reshape(1, Cout)

    tn = Cout
    if Cout > 512:
        for c in (512, 384, 256, 128):
            if Cout % c == 0:
                tn = c
                break

    has_res = residual is not None
    in_specs = [
        pl.BlockSpec((1, HW, Cin),
                     lambda j, n, d, t: (n * Dp + d * st + t, 0, 0)),
        pl.BlockSpec((1, Cin, tn), lambda j, n, d, t: (t, 0, j)),
        pl.BlockSpec((1, tn), lambda j, n, d, t: (0, j)),
    ]
    inputs = [xr, wr, br]
    if has_res:
        assert residual.shape == (N, Do, H, W, Cout), residual.shape
        inputs.append(residual.reshape(N * Do, HW, Cout).astype(jnp.bfloat16))
        in_specs.append(
            pl.BlockSpec((1, HW, tn), lambda j, n, d, t: (n * Do + d, 0, j)))

    out = pl.pallas_call(
        functools.partial(_tconv_kernel, act=act, nt=kt, has_res=has_res),
        out_shape=jax.ShapeDtypeStruct((N * Do, HW, Cout), out_dtype),
        grid_spec=pltpu.PrefetchScalarGridSpec(
            num_scalar_prefetch=0,
            grid=(Cout // tn, N, Do, kt),
            in_specs=in_specs,
            out_specs=pl.BlockSpec((1, HW, tn),
                                   lambda j, n, d, t: (n * Do + d, 0, j)),
            scratch_shapes=[pltpu.VMEM((HW, tn), jnp.float32)],
        ),
        compiler_params=pltpu.CompilerParams(
            dimension_semantics=("parallel", "parallel", "parallel",
                                 "arbitrary"),
            vmem_limit_bytes=_VMEM_LIMIT),
    )(*inputs)
    return out.reshape(N, Do, H, W, Cout)


# ----------------------------------------------------------------------------
# Conv3d dispatcher: fused temporal path where it pays off, else im2col + GEMM
# ----------------------------------------------------------------------------
def conv3d(x, w, bias, stride, padding, act, residual=None,
           out_dtype=jnp.bfloat16):
    """x: [N,D,H,W,Cin] bf16 (channels persistently padded).
       w: [kt,kh,kw,Cin,Cout] bf16 with folded-BN scale.  bias: [Cout] f32."""
    N, D, H, W, Cin = x.shape
    kt, kh, kw, wcin, Cout = w.shape
    assert wcin == Cin, (wcin, Cin)
    st, sh, sw = stride
    pt, ph, pw = padding

    # Fused-tap path for temporal (k,1,1) convolutions with a wide-enough
    # per-frame GEMM: the 3x im2col matrix never hits HBM.
    if (kh == 1 and kw == 1 and kt > 1 and sh == 1 and sw == 1
            and ph == 0 and pw == 0 and H * W >= _FUSE_HW_MIN):
        return temporal_conv_fused(x, w, bias, st, pt, act,
                                   residual=residual, out_dtype=out_dtype)

    # im2col + GEMM fallback (spatial, 1x1x1, and tiny late-layer temporal).
    # TODO(synk): fuse the spatial (1,3,3) taps into the GEMM grid as well so
    #             the 9x-inflated A matrix never hits HBM.
    xp = x
    if pt or ph or pw:
        xp = jnp.pad(x, ((0, 0), (pt, pt), (ph, ph), (pw, pw), (0, 0)))
    Do = (D + 2 * pt - kt) // st + 1
    Ho = (H + 2 * ph - kh) // sh + 1
    Wo = (W + 2 * pw - kw) // sw + 1
    patches = []
    for dt in range(kt):
        for dh in range(kh):
            for dw in range(kw):
                patches.append(xp[:,
                                  dt:dt + (Do - 1) * st + 1:st,
                                  dh:dh + (Ho - 1) * sh + 1:sh,
                                  dw:dw + (Wo - 1) * sw + 1:sw,
                                  :])
    A = patches[0] if len(patches) == 1 else jnp.concatenate(patches, axis=-1)
    A = A.reshape(N * Do * Ho * Wo, kt * kh * kw * Cin)
    Bm = w.reshape(kt * kh * kw * Cin, Cout)
    res2d = None
    if residual is not None:
        res2d = residual.reshape(N * Do * Ho * Wo, Cout)
    out = gemm_bias_act(A, Bm, bias, act=act, out_dtype=out_dtype,
                        residual=res2d)
    return out.reshape(N, Do, Ho, Wo, Cout)


# ----------------------------------------------------------------------------
# Deterministic synthetic parameters (shapes follow torchvision r2plus1d_18)
# ----------------------------------------------------------------------------
class _PGen:
    def __init__(self, seed):
        self.key = jax.random.PRNGKey(seed)

    def __call__(self):
        self.key, sub = jax.random.split(self.key)
        return sub


def _init_conv(pg, kt, kh, kw, cin, cout):
    fan_in = kt * kh * kw * cin
    return (jax.random.normal(pg(), (kt, kh, kw, cin, cout), jnp.float32)
            * (1.0 / jnp.sqrt(fan_in)))


def _init_bn(pg, c, eps=1e-5):
    gamma = 1.0 + 0.1 * jax.random.normal(pg(), (c,), jnp.float32)
    beta = 0.1 * jax.random.normal(pg(), (c,), jnp.float32)
    mean = 0.1 * jax.random.normal(pg(), (c,), jnp.float32)
    var = 1.0 + 0.1 * jax.random.uniform(pg(), (c,), jnp.float32)
    scale = gamma / jnp.sqrt(var + eps)
    bias = beta - mean * scale
    return scale, bias


def build_params(num_classes=500, seed=0):
    pg = _PGen(seed)
    p = {}
    # Stem (R2Plus1dStem)
    p["stem"] = {
        "conv1_w": _init_conv(pg, 1, 7, 7, 3, 45), "bn1": _init_bn(pg, 45),
        "conv2_w": _init_conv(pg, 3, 1, 1, 45, 64), "bn2": _init_bn(pg, 64),
    }
    # layer1..layer4, 2 BasicBlocks each
    inplanes = 64
    layers = []
    for planes, stride, nblocks in [(64, 1, 2), (128, 2, 2),
                                    (256, 2, 2), (512, 2, 2)]:
        blocks = []
        for b in range(nblocks):
            s = stride if b == 0 else 1
            mid = (inplanes * planes * 3 * 3 * 3) // (inplanes * 3 * 3 + 3 * planes)
            blk = {
                "stride": s,
                "c1s_w": _init_conv(pg, 1, 3, 3, inplanes, mid),
                "c1s_bn": _init_bn(pg, mid),
                "c1t_w": _init_conv(pg, 3, 1, 1, mid, planes),
                "c1_bn": _init_bn(pg, planes),
                "c2s_w": _init_conv(pg, 1, 3, 3, planes, mid),
                "c2s_bn": _init_bn(pg, mid),
                "c2t_w": _init_conv(pg, 3, 1, 1, mid, planes),
                "c2_bn": _init_bn(pg, planes),
            }
            if s != 1 or inplanes != planes:
                blk["ds_w"] = _init_conv(pg, 1, 1, 1, inplanes, planes)
                blk["ds_bn"] = _init_bn(pg, planes)
            blocks.append(blk)
            inplanes = planes
        layers.append(blocks)
    p["layers"] = layers
    # fc1: Linear(512, num_classes)
    p["fc_w"] = (jax.random.normal(pg(), (512, num_classes), jnp.float32)
                 * (1.0 / jnp.sqrt(512.0)))
    p["fc_b"] = 0.01 * jax.random.normal(pg(), (num_classes,), jnp.float32)
    return p


# ----------------------------------------------------------------------------
# One-time inference prep: fold BN scale into weights, pad channels
# persistently (padded channels stay exactly 0 through the whole net), bf16.
# ----------------------------------------------------------------------------
def _fold_pad(w, bn, cin_pad):
    scale, bias = bn
    w = w * scale.reshape(1, 1, 1, 1, -1)
    cout_p = _pad_ch(w.shape[4])
    w = _pad_axis(w, 3, cin_pad)
    w = _pad_axis(w, 4, cout_p)
    b = _pad_axis(bias, 0, cout_p)
    return w.astype(jnp.bfloat16), b.astype(jnp.float32)


def prepare_inference_params(p):
    ip = {"stem": {}, "layers": []}
    st = p["stem"]
    ip["stem"]["conv1"] = _fold_pad(st["conv1_w"], st["bn1"], cin_pad=3)
    ip["stem"]["conv2"] = _fold_pad(st["conv2_w"], st["bn2"],
                                    cin_pad=_pad_ch(st["conv2_w"].shape[3]))
    for blocks in p["layers"]:
        iblocks = []
        for blk in blocks:
            ib = {"stride": blk["stride"]}
            ib["c1s"] = _fold_pad(blk["c1s_w"], blk["c1s_bn"],
                                  _pad_ch(blk["c1s_w"].shape[3]))
            ib["c1t"] = _fold_pad(blk["c1t_w"], blk["c1_bn"],
                                  _pad_ch(blk["c1t_w"].shape[3]))
            ib["c2s"] = _fold_pad(blk["c2s_w"], blk["c2s_bn"],
                                  _pad_ch(blk["c2s_w"].shape[3]))
            ib["c2t"] = _fold_pad(blk["c2t_w"], blk["c2_bn"],
                                  _pad_ch(blk["c2t_w"].shape[3]))
            if "ds_w" in blk:
                ib["ds"] = _fold_pad(blk["ds_w"], blk["ds_bn"],
                                     _pad_ch(blk["ds_w"].shape[3]))
            iblocks.append(ib)
        ip["layers"].append(iblocks)
    ip["fc"] = (p["fc_w"].astype(jnp.bfloat16), p["fc_b"].astype(jnp.float32))
    return ip


# ----------------------------------------------------------------------------
# Forward pass
# ----------------------------------------------------------------------------
def _conv2plus1d(x, spatial, temporal, stride, act_out, residual=None):
    ws, bs = spatial
    wt, bt = temporal
    # spatial (1,3,3) conv + BN(mid) + SiLU
    x = conv3d(x, ws, bs, (1, stride, stride), (0, 1, 1), act="silu")
    # temporal (3,1,1) conv + outer BN(planes); activation / residual per caller
    x = conv3d(x, wt, bt, (stride, 1, 1), (1, 0, 0), act=act_out,
               residual=residual)
    return x


def _basic_block(x, blk):
    s = blk["stride"]
    out = _conv2plus1d(x, blk["c1s"], blk["c1t"], s, act_out="silu")
    if "ds" in blk:
        wd, bd = blk["ds"]
        res = conv3d(x, wd, bd, (s, s, s), (0, 0, 0), act="none")
    else:
        res = x
    # residual add + SiLU fused into the c2 temporal conv's GEMM epilogue
    return _conv2plus1d(out, blk["c2s"], blk["c2t"], 1, act_out="silu",
                        residual=res)


def r2plus1d_18_forward(iparams, x_ncdhw):
    # PyTorch NCDHW -> internal NDHWC, bf16 activations
    x = jnp.transpose(x_ncdhw, (0, 2, 3, 4, 1)).astype(jnp.bfloat16)

    w, b = iparams["stem"]["conv1"]
    x = conv3d(x, w, b, (1, 2, 2), (0, 3, 3), act="silu")
    w, b = iparams["stem"]["conv2"]
    x = conv3d(x, w, b, (1, 1, 1), (1, 0, 0), act="silu")

    for blocks in iparams["layers"]:
        for blk in blocks:
            x = _basic_block(x, blk)

    # AdaptiveAvgPool3d((1,1,1)) + flatten(1)  (tiny reduction -> plain JAX glue)
    feat = jnp.mean(x.astype(jnp.float32), axis=(1, 2, 3))       # [N, 512]

    # Dropout(p=0.5): identity in eval mode.
    # fc1: Linear(512, num_classes) -> same Pallas GEMM kernel (bias epilogue)
    w, b = iparams["fc"]
    logits = gemm_bias_act(feat.astype(jnp.bfloat16), w, b,
                           act="none", out_dtype=jnp.float32)
    return logits


# ----------------------------------------------------------------------------
if __name__ == "__main__":
    key = jax.random.PRNGKey(0)
    # Small shapes consistent with a 3-channel video clip:
    # batch=2, C=3, T=8, H=W=16  (final feature map is [2,1,1,1,512]).
    N, C, D, H, W = 2, 3, 8, 16, 16
    x = jax.random.normal(key, (N, C, D, H, W), jnp.float32)

    params = build_params(num_classes=500, seed=0)
    iparams = prepare_inference_params(params)

    out = r2plus1d_18_forward(iparams, x)
    out = jax.block_until_ready(out)

    assert out.shape == (N, 500), out.shape
    assert bool(jnp.all(jnp.isfinite(out)))
    print("KERNEL_OK")
</pallas_src>

<mosaic_0001>
module attributes {stable_mosaic.version = 11 : i64} {
  func.func @_gemm_bias_act_kernel(%arg0: i32, %arg1: i32, %arg2: memref<512x160xbf16, #tpu.memory_space<vmem>>, %arg3: memref<160x64xbf16, #tpu.memory_space<vmem>>, %arg4: memref<1x64xf32, #tpu.memory_space<vmem>>, %arg5: memref<512x64xbf16, #tpu.memory_space<vmem>>) attributes {dimension_semantics = [#tpu.dimension_semantics<parallel>, #tpu.dimension_semantics<parallel>], iteration_bounds = array<i64: 1, 2>, scalar_prefetch = 0 : i64, scratch_operands = 0 : i64, tpu.core_type = #tpu.core_type<tc>, window_params = [{transform_indices = @transform_0, window_bounds = array<i64: 512, 160>}, {transform_indices = @transform_1, window_bounds = array<i64: 160, 64>}, {transform_indices = @transform_2, window_bounds = array<i64: 1, 64>}, {transform_indices = @transform_3, window_bounds = array<i64: 512, 64>}]} {
    %c0 = arith.constant 0 : index
    %c0_0 = arith.constant 0 : index
    %0 = vector.load %arg2[%c0, %c0_0] : memref<512x160xbf16, #tpu.memory_space<vmem>>, vector<512x160xbf16>
    %c0_1 = arith.constant 0 : index
    %c0_2 = arith.constant 0 : index
    %1 = vector.load %arg3[%c0_1, %c0_2] : memref<160x64xbf16, #tpu.memory_space<vmem>>, vector<160x64xbf16>
    %cst = arith.constant dense<0.000000e+00> : vector<512x64xf32>
    %2 = tpu.matmul %0, %1, %cst {dimension_numbers = #tpu.dot_dimension_numbers<[1], [0], [0], [1], [0, 0, 1, 1], [], []>} : vector<512x160xbf16>, vector<160x64xbf16>, vector<512x64xf32> -> vector<512x64xf32>
    %c0_3 = arith.constant 0 : index
    %c0_4 = arith.constant 0 : index
    %3 = vector.load %arg4[%c0_3, %c0_4] : memref<1x64xf32, #tpu.memory_space<vmem>>, vector<1x64xf32>
    %4 = vector.broadcast %3 : vector<1x64xf32> to vector<512x64xf32>
    %5 = arith.addf %2, %4 : vector<512x64xf32>
    %6 = arith.negf %5 : vector<512x64xf32>
    %7 = math.exp %6 : vector<512x64xf32>
    %cst_5 = arith.constant 1.000000e+00 : f32
    %8 = vector.broadcast %cst_5 : f32 to vector<512x64xf32>
    %9 = arith.addf %8, %7 : vector<512x64xf32>
    %10 = arith.divf %8, %9 : vector<512x64xf32>
    %11 = arith.mulf %5, %10 : vector<512x64xf32>
    %12 = arith.truncf %11 : vector<512x64xf32> to vector<512x64xbf16>
    %c0_6 = arith.constant 0 : index
    %c0_7 = arith.constant 0 : index
    %13 = vector.load %arg5[%c0_6, %c0_7] : memref<512x64xbf16, #tpu.memory_space<vmem>>, vector<512x64xbf16>
    tpu.vector_store %arg5[%c0_6, %c0_7], %12 {strides = array<i32>} : memref<512x64xbf16, #tpu.memory_space<vmem>>, vector<512x64xbf16>,
    return
  }
  func.func @transform_0(%arg0: i32, %arg1: i32) -> (i32, i32) {
    %c0_i32 = arith.constant 0 : i32
    %c0_i32_0 = arith.constant 0 : i32
    return %arg1, %c0_i32 : i32, i32
  }
  func.func @transform_1(%arg0: i32, %arg1: i32) -> (i32, i32) {
    %c0_i32 = arith.constant 0 : i32
    %c0_i32_0 = arith.constant 0 : i32
    return %c0_i32, %arg0 : i32, i32
  }
  func.func @transform_2(%arg0: i32, %arg1: i32) -> (i32, i32) {
    %c0_i32 = arith.constant 0 : i32
    %c0_i32_0 = arith.constant 0 : i32
    return %c0_i32, %arg0 : i32, i32
  }
  func.func @transform_3(%arg0: i32, %arg1: i32) -> (i32, i32) {
    %c0_i32 = arith.constant 0 : i32
    return %arg1, %arg0 : i32, i32
  }
}

</mosaic_0001>

<llo_original>
// kernel: tpu_custom_call.1
$region0: #{tpu_custom_call.1}
  #allocation0 [shape = 'u32[]', space=smem, size = 0x4, offset = 0x4, fixed_abs, tag = 'smem constant byte address 0x4 - core index']
  #allocation1 [shape = 'u32[72,128]{1,0:T(1,128)}', space=vmem, size = 0x9000, scoped, tag = 'internal scratch']
  %s0 = inlined_call_operand.vmem [shape: bf16[1024,160], index: 0, kind: input, shape index: {}]
  %s1 = inlined_call_operand.vmem [shape: bf16[160,64], index: 1, kind: input, shape index: {}]
  %s2 = inlined_call_operand.vmem [shape: f32[1,64], index: 2, kind: input, shape index: {}]
  %s3 = inlined_call_operand.vmem [shape: bf16[1024,64], index: 3, kind: output, shape index: {}]
  %s4 = sld [smem:[#allocation0]]
  $region45: #{tpu_custom_call.1} parent=0
    _
  %s6 = ssub.s32 1, %s4
  %s7 = scalar_select 0, %s6, %s4
  loop: start=0, step=1, limit=4
  $region2: #{tpu_custom_call.1} parent=0 // loop_pre_header
    _
  $region3: #{tpu_custom_call.1} parent=0 // loop_header
    %s9 = sphi 0, %s13
    %p10 = scmp.ge.s32.totalorder %s9, 4
    %s16 = sphi 0, %s28
    %s17 = sphi 0, %s24
    %s18 = sphi 0, %s16
    %s19 = sphi 0, %s17
    %s20 = sphi 0, %s18
    %s21 = sphi 0, %s19
    %s31 = sphi 0, %s33
    %s34 = sphi 0, %s31
    %s35 = sphi 0, %s34
    %s51 = sphi 0, %s35
    %s57 = sphi 0, %s59
    %s60 = sphi 0, %s57
    %s61 = sphi 0, %s60
    %s77 = sphi 0, %s61
    %s83 = sphi 0, %s85
    %s86 = sphi 0, %s83
    %s87 = sphi 0, %s86
    %s103 = sphi 0, %s87
    %s111 = sphi 0, %s113
    %s114 = sphi 0, %s111
    %s115 = sphi 0, %s114
    %s131 = sphi 0, %s115
  $region4: #{tpu_custom_call.1} parent=0 // loop_header_branch
    %12 = sbr.rel (%p10) target = $region8
  $region5: #{tpu_custom_call.1} parent=0 // loop_body
    %s14 = ssub.s32 %s9, 1
    %s15 = ssub.s32 %s9, 2
    %s22 = sadd.s32 1, %s17
    %p23 = scmp.ge.s32.totalorder %s22, 2
    %s24 = scalar_select %p23, 0, %s22
    %s25 = sadd.s32 1, %s16
    %s26 = scalar_select %p23, %s25, %s16
    %p27 = scmp.ge.s32.totalorder %s26, 1
    %s28 = scalar_select %p27, 0, %s26
    %s29 = ssub.s32 %s17, %s24
    %p30 = scmp.eq.s32.totalorder %s29, 0
    %s32 = sadd.s32 %s31, 1
    %s33 = scalar_select %p30, %s31, %s32
    %p36 = pneg %p30
    %p37 = scmp.eq.s32.totalorder %s9, 1
    %p38 = por %p36, %p37
    %p39 = scmp.ne.s32.totalorder %s31, %s34
    %p40 = scmp.eq.s32.totalorder %s9, 0
    %p41 = por %p39, %p40
    %p42 = scmp.ne.s32.totalorder %s31, %s34
    %p43 = scmp.eq.s32.totalorder %s14, 1
    %p44 = por %p42, %p43
    %p45 = scmp.ne.s32.totalorder %s34, %s35
    %p46 = scmp.eq.s32.totalorder %s14, 0
    %p47 = por %p45, %p46
    %p48 = scmp.ne.s32.totalorder %s34, %s35
    %p49 = scmp.eq.s32.totalorder %s15, 1
    %p50 = por %p48, %p49
    %p52 = scmp.ne.s32.totalorder %s35, %s51
    %p53 = scmp.eq.s32.totalorder %s15, 0
    %p54 = por %p52, %p53
    %s55 = ssub.s32 %s16, %s28
    %p56 = scmp.eq.s32.totalorder %s55, 0
    %s58 = sadd.s32 %s57, 1
    %s59 = scalar_select %p56, %s57, %s58
    %p62 = pneg %p56
    %p63 = scmp.eq.s32.totalorder %s9, 1
    %p64 = por %p62, %p63
    %p65 = scmp.ne.s32.totalorder %s57, %s60
    %p66 = scmp.eq.s32.totalorder %s9, 0
    %p67 = por %p65, %p66
    %p68 = scmp.ne.s32.totalorder %s57, %s60
    %p69 = scmp.eq.s32.totalorder %s14, 1
    %p70 = por %p68, %p69
    %p71 = scmp.ne.s32.totalorder %s60, %s61
    %p72 = scmp.eq.s32.totalorder %s14, 0
    %p73 = por %p71, %p72
    %p74 = scmp.ne.s32.totalorder %s60, %s61
    %p75 = scmp.eq.s32.totalorder %s15, 1
    %p76 = por %p74, %p75
    %p78 = scmp.ne.s32.totalorder %s61, %s77
    %p79 = scmp.eq.s32.totalorder %s15, 0
    %p80 = por %p78, %p79
    %s81 = ssub.s32 %s16, %s28
    %p82 = scmp.eq.s32.totalorder %s81, 0
    %s84 = sadd.s32 %s83, 1
    %s85 = scalar_select %p82, %s83, %s84
    %p88 = pneg %p82
    %p89 = scmp.eq.s32.totalorder %s9, 1
    %p90 = por %p88, %p89
    %p91 = scmp.ne.s32.totalorder %s83, %s86
    %p92 = scmp.eq.s32.totalorder %s9, 0
    %p93 = por %p91, %p92
    %p94 = scmp.ne.s32.totalorder %s83, %s86
    %p95 = scmp.eq.s32.totalorder %s14, 1
    %p96 = por %p94, %p95
    %p97 = scmp.ne.s32.totalorder %s86, %s87
    %p98 = scmp.eq.s32.totalorder %s14, 0
    %p99 = por %p97, %p98
    %p100 = scmp.ne.s32.totalorder %s86, %s87
    %p101 = scmp.eq.s32.totalorder %s15, 1
    %p102 = por %p100, %p101
    %p104 = scmp.ne.s32.totalorder %s87, %s103
    %p105 = scmp.eq.s32.totalorder %s15, 0
    %p106 = por %p104, %p105
    %s107 = ssub.s32 %s17, %s24
    %s108 = ssub.s32 %s16, %s28
    %s109 = sor.u32 %s107, %s108
    %p110 = scmp.eq.s32.totalorder %s109, 0
    %s112 = sadd.s32 %s111, 1
    %s113 = scalar_select %p110, %s111, %s112
    %p116 = pneg %p110
    %p117 = scmp.eq.s32.totalorder %s9, 1
    %p118 = por %p116, %p117
    %p119 = scmp.ne.s32.totalorder %s111, %s114
    %p120 = scmp.eq.s32.totalorder %s9, 0
    %p121 = por %p119, %p120
    %p122 = scmp.ne.s32.totalorder %s111, %s114
    %p123 = scmp.eq.s32.totalorder %s14, 1
    %p124 = por %p122, %p123
    %p125 = scmp.ne.s32.totalorder %s114, %s115
    %p126 = scmp.eq.s32.totalorder %s14, 0
    %p127 = por %p125, %p126
    %p128 = scmp.ne.s32.totalorder %s114, %s115
    %p129 = scmp.eq.s32.totalorder %s15, 1
    %p130 = por %p128, %p129
    %p132 = scmp.ne.s32.totalorder %s115, %s131
    %p133 = scmp.eq.s32.totalorder %s15, 0
    %p134 = por %p132, %p133
    %p135 = scmp.le.s32.totalorder 1, %s9
    %p136 = scmp.lt.s32.totalorder %s9, 3
    %p137 = pnand %p135, %p136
    %p138 = pneg %p137
    // Predicated region
    $region9: #{tpu_custom_call.1} parent=5 // pred_check
      _
    $region10: #{tpu_custom_call.1} parent=5 // pred_check_branch
      %140 = sbr.rel (%p137) target = $region12
    $region11: #{tpu_custom_call.1} parent=5 // pred_region
      %s141 = ssub.s32 %s9, 1
      // Predicated region
      $region13: #{tpu_custom_call.1} parent=11 // pred_check
        %p142 = pneg %p73
      $region14: #{tpu_custom_call.1} parent=11 // pred_check_branch
        %144 = sbr.rel (%p142) target = $region16
      $region15: #{tpu_custom_call.1} parent=11 // pred_region
        %p145 = scmp.lt.s32.totalorder %s18, 0
        %s146 = scalar_select %p145, %s18, 0
        %s147 = smul.addr %s146, 4
        %s148 = scalar_lea.vmem %s1, %s147
      $region16: #{tpu_custom_call.1} parent=11 // pred_fallthru
        _
      // Predicated region
      $region17: #{tpu_custom_call.1} parent=11 // pred_check
        %p149 = pneg %p99
      $region18: #{tpu_custom_call.1} parent=11 // pred_check_branch
        %151 = sbr.rel (%p149) target = $region20
      $region19: #{tpu_custom_call.1} parent=11 // pred_region
        %p152 = scmp.lt.s32.totalorder %s18, 0
        %s153 = scalar_select %p152, %s18, 0
        %s154 = scalar_lea.vmem %s2, %s153
      $region20: #{tpu_custom_call.1} parent=11 // pred_fallthru
        _
    $region12: #{tpu_custom_call.1} parent=5 // pred_fallthru
      _
    %p155 = scmp.lt.s32.totalorder %s9, 2
    // Predicated region
    $region21: #{tpu_custom_call.1} parent=5 // pred_check
      %p156 = pneg %p155
    $region22: #{tpu_custom_call.1} parent=5 // pred_check_branch
      %158 = sbr.rel (%p156) target = $region24
    $region23: #{tpu_custom_call.1} parent=5 // pred_region
      // Predicated region
      $region25: #{tpu_custom_call.1} parent=23 // pred_check
        %p159 = pneg %p41
      $region26: #{tpu_custom_call.1} parent=23 // pred_check_branch
        %161 = sbr.rel (%p159) target = $region28
      $region27: #{tpu_custom_call.1} parent=23 // pred_region
        %s162 = smul.u32 64, %s17
        %p163 = scmp.lt.s32.totalorder %s162, 127
        %s164 = scalar_select %p163, %s162, 127
        %s165 = smul.addr %s164, 2
        %s166 = smul.addr %s165, 4
        %s167 = scalar_lea.vmem %s0, %s166
        %s168 = smul.u32 64, %s17
      $region28: #{tpu_custom_call.1} parent=23 // pred_fallthru
        _
    $region24: #{tpu_custom_call.1} parent=5 // pred_fallthru
      _
    %p169 = scmp.le.s32.totalorder 1, %s9
    %p170 = scmp.lt.s32.totalorder %s9, 3
    %p171 = pnand %p169, %p170
    %p172 = pneg %p171
    // Predicated region
    $region29: #{tpu_custom_call.1} parent=5 // pred_check
      _
    $region30: #{tpu_custom_call.1} parent=5 // pred_check_branch
      %174 = sbr.rel (%p171) target = $region32
    $region31: #{tpu_custom_call.1} parent=5 // pred_region
      %s175 = ssub.s32 %s9, 1
      %s176 = smul.u32 64, %s19
      %p177 = scmp.lt.s32.totalorder %s176, 127
      %s178 = scalar_select %p177, %s176, 127
      %s179 = smul.addr %s178, 2
      %s180 = smul.addr %s179, 4
      %s181 = scalar_lea.vmem %s0, %s180
      %p182 = pneg %p47
      %p183 = pneg %p44
      %p184 = scmp.lt.s32.totalorder %s18, 0
      %s185 = scalar_select %p184, %s18, 0
      %s186 = smul.addr %s185, 4
      %s187 = scalar_lea.vmem %s1, %s186
      %p188 = pneg %p73
      %p189 = pneg %p70
      %p190 = scmp.lt.s32.totalorder %s18, 0
      %s191 = scalar_select %p190, %s18, 0
      %s192 = scalar_lea.vmem %s2, %s191
      %p193 = pneg %p99
      %p194 = pneg %p96
      %p195 = pneg %p127
      %p196 = pneg %p124
      %s197 = smul.u32 64, %s19
      %p198 = scmp.lt.s32.totalorder %s197, 127
      %s199 = scalar_select %p198, %s197, 127
      %p200 = scmp.lt.s32.totalorder %s18, 0
      %s201 = scalar_select %p200, %s18, 0
      %s202 = sadd.s32 %s201, %s199
      %s203 = smul.addr %s202, 4
      %s204 = scalar_lea.vmem %s3, %s203
      %s205 = smul.u32 64, %s19
      %p206 = scmp.lt.s32.totalorder %s205, 127
      %s207 = scalar_select %p206, %s205, 127
      %s208 = smul.addr %s207, 2
      %s209 = smul.addr %s208, 4
      %s210 = scalar_lea.vmem %s0, %s209
      %s211 = smul.u32 64, %s19
      %p212 = scmp.lt.s32.totalorder %s18, 0
      %s213 = scalar_select %p212, %s18, 0
      %s214 = smul.addr %s213, 4
      %s215 = scalar_lea.vmem %s1, %s214
      %p216 = scmp.lt.s32.totalorder %s18, 0
      %s217 = scalar_select %p216, %s18, 0
      %s218 = scalar_lea.vmem %s2, %s217
      %s219 = smul.u32 64, %s19
      %p220 = scmp.lt.s32.totalorder %s219, 127
      %s221 = scalar_select %p220, %s219, 127
      %p222 = scmp.lt.s32.totalorder %s18, 0
      %s223 = scalar_select %p222, %s18, 0
      %s224 = sadd.s32 %s223, %s221
      %s225 = smul.addr %s224, 4
      %s226 = scalar_lea.vmem %s3, %s225
      %s227 = smul.u32 64, %s19
      %v229 = vld [vmem:[%s210] sm:$0xff]
      %v230 = vld [vmem:[%s210 + $0x8] sm:$0xff]
      %v231 = vld [vmem:[%s210 + $0x10] sm:$0xff]
      %v232 = vld [vmem:[%s210 + $0x18] sm:$0xff]
      %v233 = vld [vmem:[%s210 + $0x20] sm:$0xff]
      %v234 = vld [vmem:[%s210 + $0x28] sm:$0xff]
      %v235 = vld [vmem:[%s210 + $0x30] sm:$0xff]
      %v236 = vld [vmem:[%s210 + $0x38] sm:$0xff]
      %v237 = vld [vmem:[%s210 + $0x40] sm:$0xff]
      %v238 = vld [vmem:[%s210 + $0x48] sm:$0xff]
      %v239 = vld [vmem:[%s210 + $0x50] sm:$0xff]
      %v240 = vld [vmem:[%s210 + $0x58] sm:$0xff]
      %v241 = vld [vmem:[%s210 + $0x60] sm:$0xff]
      %v242 = vld [vmem:[%s210 + $0x68] sm:$0xff]
      %v243 = vld [vmem:[%s210 + $0x70] sm:$0xff]
      %v244 = vld [vmem:[%s210 + $0x78] sm:$0xff]
      %v245 = vld [vmem:[%s210 + $0x80] sm:$0xff]
      %v246 = vld [vmem:[%s210 + $0x88] sm:$0xff]
      %v247 = vld [vmem:[%s210 + $0x90] sm:$0xff]
      %v248 = vld [vmem:[%s210 + $0x98] sm:$0xff]
      %v249 = vld [vmem:[%s210 + $0xa0] sm:$0xff]
      %v250 = vld [vmem:[%s210 + $0xa8] sm:$0xff]
      %v251 = vld [vmem:[%s210 + $0xb0] sm:$0xff]
      %v252 = vld [vmem:[%s210 + $0xb8] sm:$0xff]
      %v253 = vld [vmem:[%s210 + $0xc0] sm:$0xff]
      %v254 = vld [vmem:[%s210 + $0xc8] sm:$0xff]
      %v255 = vld [vmem:[%s210 + $0xd0] sm:$0xff]
      %v256 = vld [vmem:[%s210 + $0xd8] sm:$0xff]
      %v257 = vld [vmem:[%s210 + $0xe0] sm:$0xff]
      %v258 = vld [vmem:[%s210 + $0xe8] sm:$0xff]
      %v259 = vld [vmem:[%s210 + $0xf0] sm:$0xff]
      %v260 = vld [vmem:[%s210 + $0xf8] sm:$0xff]
      %v261 = vld [vmem:[%s210 + $0x100] sm:$0xff]
      %v262 = vld [vmem:[%s210 + $0x108] sm:$0xff]
      %v263 = vld [vmem:[%s210 + $0x110] sm:$0xff]
      %v264 = vld [vmem:[%s210 + $0x118] sm:$0xff]
      %v265 = vld [vmem:[%s210 + $0x120] sm:$0xff]
      %v266 = vld [vmem:[%s210 + $0x128] sm:$0xff]
      %v267 = vld [vmem:[%s210 + $0x130] sm:$0xff]
      %v268 = vld [vmem:[%s210 + $0x138] sm:$0xff]
      %v269 = vld [vmem:[%s210 + $0x140] sm:$0xff]
      %v270 = vld [vmem:[%s210 + $0x148] sm:$0xff]
      %v271 = vld [vmem:[%s210 + $0x150] sm:$0xff]
      %v272 = vld [vmem:[%s210 + $0x158] sm:$0xff]
      %v273 = vld [vmem:[%s210 + $0x160] sm:$0xff]
      %v274 = vld [vmem:[%s210 + $0x168] sm:$0xff]
      %v275 = vld [vmem:[%s210 + $0x170] sm:$0xff]
      %v276 = vld [vmem:[%s210 + $0x178] sm:$0xff]
      %v277 = vld [vmem:[%s210 + $0x180] sm:$0xff]
      %v278 = vld [vmem:[%s210 + $0x188] sm:$0xff]
      %v279 = vld [vmem:[%s210 + $0x190] sm:$0xff]
      %v280 = vld [vmem:[%s210 + $0x198] sm:$0xff]
      %v281 = vld [vmem:[%s210 + $0x1a0] sm:$0xff]
      %v282 = vld [vmem:[%s210 + $0x1a8] sm:$0xff]
      %v283 = vld [vmem:[%s210 + $0x1b0] sm:$0xff]
      %v284 = vld [vmem:[%s210 + $0x1b8] sm:$0xff]
      %v285 = vld [vmem:[%s210 + $0x1c0] sm:$0xff]
      %v286 = vld [vmem:[%s210 + $0x1c8] sm:$0xff]
      %v287 = vld [vmem:[%s210 + $0x1d0] sm:$0xff]
      %v288 = vld [vmem:[%s210 + $0x1d8] sm:$0xff]
      %v289 = vld [vmem:[%s210 + $0x1e0] sm:$0xff]
      %v290 = vld [vmem:[%s210 + $0x1e8] sm:$0xff]
      %v291 = vld [vmem:[%s210 + $0x1f0] sm:$0xff]
      %v292 = vld [vmem:[%s210 + $0x1f8] sm:$0xff]
      %v293 = vld [vmem:[%s215] sm:$0xf]
      %v294 = vld [vmem:[%s215 + $0x4] sm:$0xf]
      %v295 = vld [vmem:[%s215 + $0x8] sm:$0xf]
      %v296 = vld [vmem:[%s215 + $0xc] sm:$0xf]
      %v297 = vld [vmem:[%s215 + $0x10] sm:$0xf]
      %v298 = vld [vmem:[%s215 + $0x14] sm:$0xf]
      %v299 = vld [vmem:[%s215 + $0x18] sm:$0xf]
      %v300 = vld [vmem:[%s215 + $0x1c] sm:$0xf]
      %v301 = vld [vmem:[%s215 + $0x20] sm:$0xf]
      %v302 = vld [vmem:[%s215 + $0x24] sm:$0xf]
      %v303 = vld [vmem:[%s215 + $0x28] sm:$0xf]
      %v304 = vld [vmem:[%s215 + $0x2c] sm:$0xf]
      %v305 = vld [vmem:[%s215 + $0x30] sm:$0xf]
      %v306 = vld [vmem:[%s215 + $0x34] sm:$0xf]
      %v307 = vld [vmem:[%s215 + $0x38] sm:$0xf]
      %v308 = vld [vmem:[%s215 + $0x3c] sm:$0xf]
      %v309 = vld [vmem:[%s215 + $0x40] sm:$0xf]
      %v310 = vld [vmem:[%s215 + $0x44] sm:$0xf]
      %v311 = vld [vmem:[%s215 + $0x48] sm:$0xf]
      %v312 = vld [vmem:[%s215 + $0x4c] sm:$0xf]
      %v313 = vld [vmem:[%s218] sm:$0x1]
      %v315 = vperm.slane %v313, 0
      %v381 = vunpack.c.l.b16 %v229
      %v382 = vunpack.c.h.b16 %v229
      %v383 = vunpack.c.l.b16 %v230
      %v384 = vunpack.c.h.b16 %v230
      %v385 = vunpack.c.l.b16 %v231
      %v386 = vunpack.c.h.b16 %v231
      %v387 = vunpack.c.l.b16 %v232
      %v388 = vunpack.c.h.b16 %v232
      %v389 = vunpack.c.l.b16 %v233
      %v390 = vunpack.c.h.b16 %v233
      %v391 = vunpack.c.l.b16 %v234
      %v392 = vunpack.c.h.b16 %v234
      %v393 = vunpack.c.l.b16 %v235
      %v394 = vunpack.c.h.b16 %v235
      %v395 = vunpack.c.l.b16 %v236
      %v396 = vunpack.c.h.b16 %v236
      %v397 = vunpack.c.l.b16 %v237
      %v398 = vunpack.c.h.b16 %v237
      %v399 = vunpack.c.l.b16 %v238
      %v400 = vunpack.c.h.b16 %v238
      %v401 = vunpack.c.l.b16 %v239
      %v402 = vunpack.c.h.b16 %v239
      %v403 = vunpack.c.l.b16 %v240
      %v404 = vunpack.c.h.b16 %v240
      %v405 = vunpack.c.l.b16 %v241
      %v406 = vunpack.c.h.b16 %v241
      %v407 = vunpack.c.l.b16 %v242
      %v408 = vunpack.c.h.b16 %v242
      %v409 = vunpack.c.l.b16 %v243
      %v410 = vunpack.c.h.b16 %v243
      %v411 = vunpack.c.l.b16 %v244
      %v412 = vunpack.c.h.b16 %v244
      %v413 = vunpack.c.l.b16 %v245
      %v414 = vunpack.c.h.b16 %v245
      %v415 = vunpack.c.l.b16 %v246
      %v416 = vunpack.c.h.b16 %v246
      %v417 = vunpack.c.l.b16 %v247
      %v418 = vunpack.c.h.b16 %v247
      %v419 = vunpack.c.l.b16 %v248
      %v420 = vunpack.c.h.b16 %v248
      %v421 = vunpack.c.l.b16 %v249
      %v422 = vunpack.c.h.b16 %v249
      %v423 = vunpack.c.l.b16 %v250
      %v424 = vunpack.c.h.b16 %v250
      %v425 = vunpack.c.l.b16 %v251
      %v426 = vunpack.c.h.b16 %v251
      %v427 = vunpack.c.l.b16 %v252
      %v428 = vunpack.c.h.b16 %v252
      %v429 = vunpack.c.l.b16 %v253
      %v430 = vunpack.c.h.b16 %v253
      %v431 = vunpack.c.l.b16 %v254
      %v432 = vunpack.c.h.b16 %v254
      %v433 = vunpack.c.l.b16 %v255
      %v434 = vunpack.c.h.b16 %v255
      %v435 = vunpack.c.l.b16 %v256
      %v436 = vunpack.c.h.b16 %v256
      %v437 = vunpack.c.l.b16 %v257
      %v438 = vunpack.c.h.b16 %v257
      %v439 = vunpack.c.l.b16 %v258
      %v440 = vunpack.c.h.b16 %v258
      %v441 = vunpack.c.l.b16 %v259
      %v442 = vunpack.c.h.b16 %v259
      %v443 = vunpack.c.l.b16 %v260
      %v444 = vunpack.c.h.b16 %v260
      %v445 = vunpack.c.l.b16 %v261
      %v446 = vunpack.c.h.b16 %v261
      %v447 = vunpack.c.l.b16 %v262
      %v448 = vunpack.c.h.b16 %v262
      %v449 = vunpack.c.l.b16 %v263
      %v450 = vunpack.c.h.b16 %v263
      %v451 = vunpack.c.l.b16 %v264
      %v452 = vunpack.c.h.b16 %v264
      %v453 = vunpack.c.l.b16 %v265
      %v454 = vunpack.c.h.b16 %v265
      %v455 = vunpack.c.l.b16 %v266
      %v456 = vunpack.c.h.b16 %v266
      %v457 = vunpack.c.l.b16 %v267
      %v458 = vunpack.c.h.b16 %v267
      %v459 = vunpack.c.l.b16 %v268
      %v460 = vunpack.c.h.b16 %v268
      %v461 = vunpack.c.l.b16 %v269
      %v462 = vunpack.c.h.b16 %v269
      %v463 = vunpack.c.l.b16 %v270
      %v464 = vunpack.c.h.b16 %v270
      %v465 = vunpack.c.l.b16 %v271
      %v466 = vunpack.c.h.b16 %v271
      %v467 = vunpack.c.l.b16 %v272
      %v468 = vunpack.c.h.b16 %v272
      %v469 = vunpack.c.l.b16 %v273
      %v470 = vunpack.c.h.b16 %v273
      %v471 = vunpack.c.l.b16 %v274
      %v472 = vunpack.c.h.b16 %v274
      %v473 = vunpack.c.l.b16 %v275
      %v474 = vunpack.c.h.b16 %v275
      %v475 = vunpack.c.l.b16 %v276
      %v476 = vunpack.c.h.b16 %v276
      %v477 = vunpack.c.l.b16 %v277
      %v478 = vunpack.c.h.b16 %v277
      %v479 = vunpack.c.l.b16 %v278
      %v480 = vunpack.c.h.b16 %v278
      %v481 = vunpack.c.l.b16 %v279
      %v482 = vunpack.c.h.b16 %v279
      %v483 = vunpack.c.l.b16 %v280
      %v484 = vunpack.c.h.b16 %v280
      %v485 = vunpack.c.l.b16 %v281
      %v486 = vunpack.c.h.b16 %v281
      %v487 = vunpack.c.l.b16 %v282
      %v488 = vunpack.c.h.b16 %v282
      %v489 = vunpack.c.l.b16 %v283
      %v490 = vunpack.c.h.b16 %v283
      %v491 = vunpack.c.l.b16 %v284
      %v492 = vunpack.c.h.b16 %v284
      %v493 = vunpack.c.l.b16 %v285
      %v494 = vunpack.c.h.b16 %v285
      %v495 = vunpack.c.l.b16 %v286
      %v496 = vunpack.c.h.b16 %v286
      %v497 = vunpack.c.l.b16 %v287
      %v498 = vunpack.c.h.b16 %v287
      %v499 = vunpack.c.l.b16 %v288
      %v500 = vunpack.c.h.b16 %v288
      %v501 = vunpack.c.l.b16 %v289
      %v502 = vunpack.c.h.b16 %v289
      %v503 = vunpack.c.l.b16 %v290
      %v504 = vunpack.c.h.b16 %v290
      %v505 = vunpack.c.l.b16 %v291
      %v506 = vunpack.c.h.b16 %v291
      %v507 = vunpack.c.l.b16 %v292
      %v508 = vunpack.c.h.b16 %v292
      %v509 = vpack.c.b16 %v383, %v381
      %v510 = vpack.c.b16 %v384, %v382
      %v511 = vpack.c.b16 %v387, %v385
      %v512 = vpack.c.b16 %v388, %v386
      %v513 = vpack.c.b16 %v391, %v389
      %v514 = vpack.c.b16 %v392, %v390
      %v515 = vpack.c.b16 %v395, %v393
      %v516 = vpack.c.b16 %v396, %v394
      %v517 = vpack.c.b16 %v399, %v397
      %v518 = vpack.c.b16 %v400, %v398
      %v519 = vpack.c.b16 %v403, %v401
      %v520 = vpack.c.b16 %v404, %v402
      %v521 = vpack.c.b16 %v407, %v405
      %v522 = vpack.c.b16 %v408, %v406
      %v523 = vpack.c.b16 %v411, %v409
      %v524 = vpack.c.b16 %v412, %v410
      %v525 = vpack.c.b16 %v415, %v413
      %v526 = vpack.c.b16 %v416, %v414
      %v527 = vpack.c.b16 %v419, %v417
      %v528 = vpack.c.b16 %v420, %v418
      %v529 = vpack.c.b16 %v423, %v421
      %v530 = vpack.c.b16 %v424, %v422
      %v531 = vpack.c.b16 %v427, %v425
      %v532 = vpack.c.b16 %v428, %v426
      %v533 = vpack.c.b16 %v431, %v429
      %v534 = vpack.c.b16 %v432, %v430
      %v535 = vpack.c.b16 %v435, %v433
      %v536 = vpack.c.b16 %v436, %v434
      %v537 = vpack.c.b16 %v439, %v437
      %v538 = vpack.c.b16 %v440, %v438
      %v539 = vpack.c.b16 %v443, %v441
      %v540 = vpack.c.b16 %v444, %v442
      %v541 = vpack.c.b16 %v447, %v445
      %v542 = vpack.c.b16 %v448, %v446
      %v543 = vpack.c.b16 %v451, %v449
      %v544 = vpack.c.b16 %v452, %v450
      %v545 = vpack.c.b16 %v455, %v453
      %v546 = vpack.c.b16 %v456, %v454
      %v547 = vpack.c.b16 %v459, %v457
      %v548 = vpack.c.b16 %v460, %v458
      %v549 = vpack.c.b16 %v463, %v461
      %v550 = vpack.c.b16 %v464, %v462
      %v551 = vpack.c.b16 %v467, %v465
      %v552 = vpack.c.b16 %v468, %v466
      %v553 = vpack.c.b16 %v471, %v469
      %v554 = vpack.c.b16 %v472, %v470
      %v555 = vpack.c.b16 %v475, %v473
      %v556 = vpack.c.b16 %v476, %v474
      %v557 = vpack.c.b16 %v479, %v477
      %v558 = vpack.c.b16 %v480, %v478
      %v559 = vpack.c.b16 %v483, %v481
      %v560 = vpack.c.b16 %v484, %v482
      %v561 = vpack.c.b16 %v487, %v485
      %v562 = vpack.c.b16 %v488, %v486
      %v563 = vpack.c.b16 %v491, %v489
      %v564 = vpack.c.b16 %v492, %v490
      %v565 = vpack.c.b16 %v495, %v493
      %v566 = vpack.c.b16 %v496, %v494
      %v567 = vpack.c.b16 %v499, %v497
      %v568 = vpack.c.b16 %v500, %v498
      %v569 = vpack.c.b16 %v503, %v501
      %v570 = vpack.c.b16 %v504, %v502
      %v571 = vpack.c.b16 %v507, %v505
      %v572 = vpack.c.b16 %v508, %v506
      %v625 = vunpack.c.l.b16 %v293
      %v626 = vunpack.c.l.b16 %v294
      %v627 = vunpack.c.l.b16 %v295
      %v628 = vunpack.c.l.b16 %v296
      %v629 = vunpack.c.l.b16 %v297
      %v630 = vunpack.c.l.b16 %v298
      %v631 = vunpack.c.l.b16 %v299
      %v632 = vunpack.c.l.b16 %v300
      %v633 = vunpack.c.l.b16 %v301
      %v634 = vunpack.c.l.b16 %v302
      %v635 = vunpack.c.l.b16 %v303
      %v636 = vunpack.c.l.b16 %v304
      %v637 = vunpack.c.l.b16 %v305
      %v638 = vunpack.c.l.b16 %v306
      %v639 = vunpack.c.l.b16 %v307
      %v640 = vunpack.c.l.b16 %v308
      %v641 = vunpack.c.l.b16 %v309
      %v642 = vunpack.c.l.b16 %v310
      %v643 = vunpack.c.l.b16 %v311
      %v644 = vunpack.c.l.b16 %v312
      %v645 = vpack.c.b16 %v626, %v625
      %v646 = vpack.c.b16 %v628, %v627
      %v647 = vpack.c.b16 %v630, %v629
      %v648 = vpack.c.b16 %v632, %v631
      %v649 = vpack.c.b16 %v634, %v633
      %v650 = vpack.c.b16 %v636, %v635
      %v651 = vpack.c.b16 %v638, %v637
      %v652 = vpack.c.b16 %v640, %v639
      %v653 = vpack.c.b16 %v642, %v641
      %v654 = vpack.c.b16 %v644, %v643
      %vm665 = vcmask 261120
      %v667 = vsel %vm665, %v510, 0
      %v670 = vsel %vm665, %v512, 0
      %v673 = vsel %vm665, %v514, 0
      %v676 = vsel %vm665, %v516, 0
      %v679 = vsel %vm665, %v518, 0
      %v682 = vsel %vm665, %v520, 0
      %v685 = vsel %vm665, %v522, 0
      %v688 = vsel %vm665, %v524, 0
      %v691 = vsel %vm665, %v526, 0
      %v694 = vsel %vm665, %v528, 0
      %v697 = vsel %vm665, %v530, 0
      %v700 = vsel %vm665, %v532, 0
      %v703 = vsel %vm665, %v534, 0
      %v706 = vsel %vm665, %v536, 0
      %v709 = vsel %vm665, %v538, 0
      %v712 = vsel %vm665, %v540, 0
      %v715 = vsel %vm665, %v542, 0
      %v718 = vsel %vm665, %v544, 0
      %v721 = vsel %vm665, %v546, 0
      %v724 = vsel %vm665, %v548, 0
      %v727 = vsel %vm665, %v550, 0
      %v730 = vsel %vm665, %v552, 0
      %v733 = vsel %vm665, %v554, 0
      %v736 = vsel %vm665, %v556, 0
      %v739 = vsel %vm665, %v558, 0
      %v742 = vsel %vm665, %v560, 0
      %v745 = vsel %vm665, %v562, 0
      %v748 = vsel %vm665, %v564, 0
      %v751 = vsel %vm665, %v566, 0
      %v754 = vsel %vm665, %v568, 0
      %v757 = vsel %vm665, %v570, 0
      %v760 = vsel %vm665, %v572, 0
      %762 = vmatpush.bf16.msra.mxu0 %v652
      %763 = vmatpush.bf16.msra.mxu0 %v651
      %764 = vmatpush.bf16.msra.mxu0 %v650
      %765 = vmatpush.bf16.msra.mxu0 %v649
      %766 = vmatpush.bf16.msra.mxu0 %v648
      %767 = vmatpush.bf16.msra.mxu0 %v647
      %768 = vmatpush.bf16.msra.mxu0 %v646
      %769 = vmatpush.bf16.msra.mxu0 %v645
      %770 = vmatmul.bf16.gmra.mxu0 %v509
      %v771 = vpop.f32.mrf.mxu0
      %v772 = vadd.f32 %v315, %v771
      %v773 = vpop.f32.mrf.mxu0
      %v774 = vadd.f32 %v315, %v773
      %775 = vmatmul.bf16.gmra.mxu0 %v511
      %v776 = vpop.f32.mrf.mxu0
      %v777 = vadd.f32 %v315, %v776
      %v778 = vpop.f32.mrf.mxu0
      %v779 = vadd.f32 %v315, %v778
      %780 = vmatmul.bf16.gmra.mxu0 %v513
      %v781 = vpop.f32.mrf.mxu0
      %v782 = vadd.f32 %v315, %v781
      %v783 = vpop.f32.mrf.mxu0
      %v784 = vadd.f32 %v315, %v783
      %785 = vmatmul.bf16.gmra.mxu0 %v515
      %v786 = vpop.f32.mrf.mxu0
      %v787 = vadd.f32 %v315, %v786
      %v788 = vpop.f32.mrf.mxu0
      %v789 = vadd.f32 %v315, %v788
      %790 = vmatmul.bf16.gmra.mxu0 %v517
      %v791 = vpop.f32.mrf.mxu0
      %v792 = vadd.f32 %v315, %v791
      %v793 = vpop.f32.mrf.mxu0
      %v794 = vadd.f32 %v315, %v793
      %795 = vmatmul.bf16.gmra.mxu0 %v519
      %v796 = vpop.f32.mrf.mxu0
      %v797 = vadd.f32 %v315, %v796
      %v798 = vpop.f32.mrf.mxu0
      %v799 = vadd.f32 %v315, %v798
      %800 = vmatmul.bf16.gmra.mxu0 %v521
      %v801 = vpop.f32.mrf.mxu0
      %v802 = vadd.f32 %v315, %v801
      %v803 = vpop.f32.mrf.mxu0
      %v804 = vadd.f32 %v315, %v803
      %805 = vmatmul.bf16.gmra.mxu0 %v523
      %v806 = vpop.f32.mrf.mxu0
      %v807 = vadd.f32 %v315, %v806
      %v808 = vpop.f32.mrf.mxu0
      %v809 = vadd.f32 %v315, %v808
      %810 = vmatmul.bf16.gmra.mxu0 %v525
      %v811 = vpop.f32.mrf.mxu0
      %v812 = vadd.f32 %v315, %v811
      %v813 = vpop.f32.mrf.mxu0
      %v814 = vadd.f32 %v315, %v813
      %815 = vmatmul.bf16.gmra.mxu0 %v527
      %v816 = vpop.f32.mrf.mxu0
      %v817 = vadd.f32 %v315, %v816
      %v818 = vpop.f32.mrf.mxu0
      %v819 = vadd.f32 %v315, %v818
      %820 = vmatmul.bf16.gmra.mxu0 %v529
      %v821 = vpop.f32.mrf.mxu0
      %v822 = vadd.f32 %v315, %v821
      %v823 = vpop.f32.mrf.mxu0
      %v824 = vadd.f32 %v315, %v823
      %825 = vmatmul.bf16.gmra.mxu0 %v531
      %v826 = vpop.f32.mrf.mxu0
      %v827 = vadd.f32 %v315, %v826
      %v828 = vpop.f32.mrf.mxu0
      %v829 = vadd.f32 %v315, %v828
      %830 = vmatmul.bf16.gmra.mxu0 %v533
      %v831 = vpop.f32.mrf.mxu0
      %v832 = vadd.f32 %v315, %v831
      %v833 = vpop.f32.mrf.mxu0
      %v834 = vadd.f32 %v315, %v833
      %835 = vmatmul.bf16.gmra.mxu0 %v535
      %v836 = vpop.f32.mrf.mxu0
      %v837 = vadd.f32 %v315, %v836
      %v838 = vpop.f32.mrf.mxu0
      %v839 = vadd.f32 %v315, %v838
      %840 = vmatmul.bf16.gmra.mxu0 %v537
      %v841 = vpop.f32.mrf.mxu0
      %v842 = vadd.f32 %v315, %v841
      %v843 = vpop.f32.mrf.mxu0
      %v844 = vadd.f32 %v315, %v843
      %845 = vmatmul.bf16.gmra.mxu0 %v539
      %v846 = vpop.f32.mrf.mxu0
      %v847 = vadd.f32 %v315, %v846
      %v848 = vpop.f32.mrf.mxu0
      %v849 = vadd.f32 %v315, %v848
      %850 = vmatmul.bf16.gmra.mxu0 %v541
      %v851 = vpop.f32.mrf.mxu0
      %v852 = vadd.f32 %v315, %v851
      %v853 = vpop.f32.mrf.mxu0
      %v854 = vadd.f32 %v315, %v853
      %855 = vmatmul.bf16.gmra.mxu0 %v543
      %v856 = vpop.f32.mrf.mxu0
      %v857 = vadd.f32 %v315, %v856
      %v858 = vpop.f32.mrf.mxu0
      %v859 = vadd.f32 %v315, %v858
      %860 = vmatmul.bf16.gmra.mxu0 %v545
      %v861 = vpop.f32.mrf.mxu0
      %v862 = vadd.f32 %v315, %v861
      %v863 = vpop.f32.mrf.mxu0
      %v864 = vadd.f32 %v315, %v863
      %865 = vmatmul.bf16.gmra.mxu0 %v547
      %v866 = vpop.f32.mrf.mxu0
      %v867 = vadd.f32 %v315, %v866
      %v868 = vpop.f32.mrf.mxu0
      %v869 = vadd.f32 %v315, %v868
      %870 = vmatmul.bf16.gmra.mxu0 %v549
      %v871 = vpop.f32.mrf.mxu0
      %v872 = vadd.f32 %v315, %v871
      %v873 = vpop.f32.mrf.mxu0
      %v874 = vadd.f32 %v315, %v873
      %875 = vmatmul.bf16.gmra.mxu0 %v551
      %v876 = vpop.f32.mrf.mxu0
      %v877 = vadd.f32 %v315, %v876
      %v878 = vpop.f32.mrf.mxu0
      %v879 = vadd.f32 %v315, %v878
      %880 = vmatmul.bf16.gmra.mxu0 %v553
      %v881 = vpop.f32.mrf.mxu0
      %v882 = vadd.f32 %v315, %v881
      %v883 = vpop.f32.mrf.mxu0
      %v884 = vadd.f32 %v315, %v883
      %885 = vmatmul.bf16.gmra.mxu0 %v555
      %v886 = vpop.f32.mrf.mxu0
      %v887 = vadd.f32 %v315, %v886
      %v888 = vpop.f32.mrf.mxu0
      %v889 = vadd.f32 %v315, %v888
      %890 = vmatmul.bf16.gmra.mxu0 %v557
      %v891 = vpop.f32.mrf.mxu0
      %v892 = vadd.f32 %v315, %v891
      %v893 = vpop.f32.mrf.mxu0
      %v894 = vadd.f32 %v315, %v893
      %895 = vmatmul.bf16.gmra.mxu0 %v559
      %v896 = vpop.f32.mrf.mxu0
      %v897 = vadd.f32 %v315, %v896
      %v898 = vpop.f32.mrf.mxu0
      %v899 = vadd.f32 %v315, %v898
      %900 = vmatmul.bf16.gmra.mxu0 %v561
      %v901 = vpop.f32.mrf.mxu0
      %v902 = vadd.f32 %v315, %v901
      %v903 = vpop.f32.mrf.mxu0
      %v904 = vadd.f32 %v315, %v903
      %905 = vmatmul.bf16.gmra.mxu0 %v563
      %v906 = vpop.f32.mrf.mxu0
      %v907 = vadd.f32 %v315, %v906
      %v908 = vpop.f32.mrf.mxu0
      %v909 = vadd.f32 %v315, %v908
      %910 = vmatmul.bf16.gmra.mxu0 %v565
      %v911 = vpop.f32.mrf.mxu0
      %v912 = vadd.f32 %v315, %v911
      %v913 = vpop.f32.mrf.mxu0
      %v914 = vadd.f32 %v315, %v913
      %915 = vmatmul.bf16.gmra.mxu0 %v567
      %v916 = vpop.f32.mrf.mxu0
      %v917 = vadd.f32 %v315, %v916
      %v918 = vpop.f32.mrf.mxu0
      %v919 = vadd.f32 %v315, %v918
      %920 = vmatmul.bf16.gmra.mxu0 %v569
      %v921 = vpop.f32.mrf.mxu0
      %v922 = vadd.f32 %v315, %v921
      %v923 = vpop.f32.mrf.mxu0
      %v924 = vadd.f32 %v315, %v923
      %925 = vmatmul.bf16.gmra.mxu0 %v571
      %v926 = vpop.f32.mrf.mxu0
      %v927 = vadd.f32 %v315, %v926
      %v928 = vpop.f32.mrf.mxu0
      %v929 = vadd.f32 %v315, %v928
      %930 = vdwg.mxu0
      %931 = vmatpush.bf16.msra.mxu0 0
      %932 = vmatpush.bf16.msra.mxu0 0
      %933 = vmatpush.bf16.msra.mxu0 0
      %934 = vmatpush.bf16.msra.mxu0 0
      %935 = vmatpush.bf16.msra.mxu0 0
      %936 = vmatpush.bf16.msra.mxu0 0
      %937 = vmatpush.bf16.msra.mxu0 %v654
      %938 = vmatpush.bf16.msra.mxu0 %v653
      %939 = vmatmul.bf16.gmra.mxu0 %v667
      %v940 = vpop.f32.mrf.mxu0
      %v941 = vadd.f32 %v772, %v940
      %v942 = vpop.f32.mrf.mxu0
      %v943 = vadd.f32 %v774, %v942
      %944 = vmatmul.bf16.gmra.mxu0 %v670
      %v945 = vpop.f32.mrf.mxu0
      %v946 = vadd.f32 %v777, %v945
      %v947 = vpop.f32.mrf.mxu0
      %v948 = vadd.f32 %v779, %v947
      %949 = vmatmul.bf16.gmra.mxu0 %v673
      %v950 = vpop.f32.mrf.mxu0
      %v951 = vadd.f32 %v782, %v950
      %v952 = vpop.f32.mrf.mxu0
      %v953 = vadd.f32 %v784, %v952
      %954 = vmatmul.bf16.gmra.mxu0 %v676
      %v955 = vpop.f32.mrf.mxu0
      %v956 = vadd.f32 %v787, %v955
      %v957 = vpop.f32.mrf.mxu0
      %v958 = vadd.f32 %v789, %v957
      %959 = vmatmul.bf16.gmra.mxu0 %v679
      %v960 = vpop.f32.mrf.mxu0
      %v961 = vadd.f32 %v792, %v960
      %v962 = vpop.f32.mrf.mxu0
      %v963 = vadd.f32 %v794, %v962
      %964 = vmatmul.bf16.gmra.mxu0 %v682
      %v965 = vpop.f32.mrf.mxu0
      %v966 = vadd.f32 %v797, %v965
      %v967 = vpop.f32.mrf.mxu0
      %v968 = vadd.f32 %v799, %v967
      %969 = vmatmul.bf16.gmra.mxu0 %v685
      %v970 = vpop.f32.mrf.mxu0
      %v971 = vadd.f32 %v802, %v970
      %v972 = vpop.f32.mrf.mxu0
      %v973 = vadd.f32 %v804, %v972
      %974 = vmatmul.bf16.gmra.mxu0 %v688
      %v975 = vpop.f32.mrf.mxu0
      %v976 = vadd.f32 %v807, %v975
      %v977 = vpop.f32.mrf.mxu0
      %v978 = vadd.f32 %v809, %v977
      %979 = vmatmul.bf16.gmra.mxu0 %v691
      %v980 = vpop.f32.mrf.mxu0
      %v981 = vadd.f32 %v812, %v980
      %v982 = vpop.f32.mrf.mxu0
      %v983 = vadd.f32 %v814, %v982
      %984 = vmatmul.bf16.gmra.mxu0 %v694
      %v985 = vpop.f32.mrf.mxu0
      %v986 = vadd.f32 %v817, %v985
      %v987 = vpop.f32.mrf.mxu0
      %v988 = vadd.f32 %v819, %v987
      %989 = vmatmul.bf16.gmra.mxu0 %v697
      %v990 = vpop.f32.mrf.mxu0
      %v991 = vadd.f32 %v822, %v990
      %v992 = vpop.f32.mrf.mxu0
      %v993 = vadd.f32 %v824, %v992
      %994 = vmatmul.bf16.gmra.mxu0 %v700
      %v995 = vpop.f32.mrf.mxu0
      %v996 = vadd.f32 %v827, %v995
      %v997 = vpop.f32.mrf.mxu0
      %v998 = vadd.f32 %v829, %v997
      %999 = vmatmul.bf16.gmra.mxu0 %v703
      %v1000 = vpop.f32.mrf.mxu0
      %v1001 = vadd.f32 %v832, %v1000
      %v1002 = vpop.f32.mrf.mxu0
      %v1003 = vadd.f32 %v834, %v1002
      %1004 = vmatmul.bf16.gmra.mxu0 %v706
      %v1005 = vpop.f32.mrf.mxu0
      %v1006 = vadd.f32 %v837, %v1005
      %v1007 = vpop.f32.mrf.mxu0
      %v1008 = vadd.f32 %v839, %v1007
      %1009 = vmatmul.bf16.gmra.mxu0 %v709
      %v1010 = vpop.f32.mrf.mxu0
      %v1011 = vadd.f32 %v842, %v1010
      %v1012 = vpop.f32.mrf.mxu0
      %v1013 = vadd.f32 %v844, %v1012
      %1014 = vmatmul.bf16.gmra.mxu0 %v712
      %v1015 = vpop.f32.mrf.mxu0
      %v1016 = vadd.f32 %v847, %v1015
      %v1017 = vpop.f32.mrf.mxu0
      %v1018 = vadd.f32 %v849, %v1017
      %1019 = vmatmul.bf16.gmra.mxu0 %v715
      %v1020 = vpop.f32.mrf.mxu0
      %v1021 = vadd.f32 %v852, %v1020
      %v1022 = vpop.f32.mrf.mxu0
      %v1023 = vadd.f32 %v854, %v1022
      %1024 = vmatmul.bf16.gmra.mxu0 %v718
      %v1025 = vpop.f32.mrf.mxu0
      %v1026 = vadd.f32 %v857, %v1025
      %v1027 = vpop.f32.mrf.mxu0
      %v1028 = vadd.f32 %v859, %v1027
      %1029 = vmatmul.bf16.gmra.mxu0 %v721
      %v1030 = vpop.f32.mrf.mxu0
      %v1031 = vadd.f32 %v862, %v1030
      %v1032 = vpop.f32.mrf.mxu0
      %v1033 = vadd.f32 %v864, %v1032
      %1034 = vmatmul.bf16.gmra.mxu0 %v724
      %v1035 = vpop.f32.mrf.mxu0
      %v1036 = vadd.f32 %v867, %v1035
      %v1037 = vpop.f32.mrf.mxu0
      %v1038 = vadd.f32 %v869, %v1037
      %1039 = vmatmul.bf16.gmra.mxu0 %v727
      %v1040 = vpop.f32.mrf.mxu0
      %v1041 = vadd.f32 %v872, %v1040
      %v1042 = vpop.f32.mrf.mxu0
      %v1043 = vadd.f32 %v874, %v1042
      %1044 = vmatmul.bf16.gmra.mxu0 %v730
      %v1045 = vpop.f32.mrf.mxu0
      %v1046 = vadd.f32 %v877, %v1045
      %v1047 = vpop.f32.mrf.mxu0
      %v1048 = vadd.f32 %v879, %v1047
      %1049 = vmatmul.bf16.gmra.mxu0 %v733
      %v1050 = vpop.f32.mrf.mxu0
      %v1051 = vadd.f32 %v882, %v1050
      %v1052 = vpop.f32.mrf.mxu0
      %v1053 = vadd.f32 %v884, %v1052
      %1054 = vmatmul.bf16.gmra.mxu0 %v736
      %v1055 = vpop.f32.mrf.mxu0
      %v1056 = vadd.f32 %v887, %v1055
      %v1057 = vpop.f32.mrf.mxu0
      %v1058 = vadd.f32 %v889, %v1057
      %1059 = vmatmul.bf16.gmra.mxu0 %v739
      %v1060 = vpop.f32.mrf.mxu0
      %v1061 = vadd.f32 %v892, %v1060
      %v1062 = vpop.f32.mrf.mxu0
      %v1063 = vadd.f32 %v894, %v1062
      %1064 = vmatmul.bf16.gmra.mxu0 %v742
      %v1065 = vpop.f32.mrf.mxu0
      %v1066 = vadd.f32 %v897, %v1065
      %v1067 = vpop.f32.mrf.mxu0
      %v1068 = vadd.f32 %v899, %v1067
      %1069 = vmatmul.bf16.gmra.mxu0 %v745
      %v1070 = vpop.f32.mrf.mxu0
      %v1071 = vadd.f32 %v902, %v1070
      %v1072 = vpop.f32.mrf.mxu0
      %v1073 = vadd.f32 %v904, %v1072
      %1074 = vmatmul.bf16.gmra.mxu0 %v748
      %v1075 = vpop.f32.mrf.mxu0
      %v1076 = vadd.f32 %v907, %v1075
      %v1077 = vpop.f32.mrf.mxu0
      %v1078 = vadd.f32 %v909, %v1077
      %1079 = vmatmul.bf16.gmra.mxu0 %v751
      %v1080 = vpop.f32.mrf.mxu0
      %v1081 = vadd.f32 %v912, %v1080
      %v1082 = vpop.f32.mrf.mxu0
      %v1083 = vadd.f32 %v914, %v1082
      %1084 = vmatmul.bf16.gmra.mxu0 %v754
      %v1085 = vpop.f32.mrf.mxu0
      %v1086 = vadd.f32 %v917, %v1085
      %v1087 = vpop.f32.mrf.mxu0
      %v1088 = vadd.f32 %v919, %v1087
      %1089 = vmatmul.bf16.gmra.mxu0 %v757
      %v1090 = vpop.f32.mrf.mxu0
      %v1091 = vadd.f32 %v922, %v1090
      %v1092 = vpop.f32.mrf.mxu0
      %v1093 = vadd.f32 %v924, %v1092
      %1094 = vmatmul.bf16.gmra.mxu0 %v760
      %v1095 = vpop.f32.mrf.mxu0
      %v1096 = vadd.f32 %v927, %v1095
      %v1097 = vpop.f32.mrf.mxu0
      %v1098 = vadd.f32 %v929, %v1097
      %1099 = vdwg.mxu0
      %v1100 = vxor.u32 %v941, 2147483648
      %v1101 = vxor.u32 %v943, 2147483648
      %v1102 = vxor.u32 %v946, 2147483648
      %v1103 = vxor.u32 %v948, 2147483648
      %v1104 = vxor.u32 %v951, 2147483648
      %v1105 = vxor.u32 %v953, 2147483648
      %v1106 = vxor.u32 %v956, 2147483648
      %v1107 = vxor.u32 %v958, 2147483648
      %v1108 = vxor.u32 %v961, 2147483648
      %v1109 = vxor.u32 %v963, 2147483648
      %v1110 = vxor.u32 %v966, 2147483648
      %v1111 = vxor.u32 %v968, 2147483648
      %v1112 = vxor.u32 %v971, 2147483648
      %v1113 = vxor.u32 %v973, 2147483648
      %v1114 = vxor.u32 %v976, 2147483648
      %v1115 = vxor.u32 %v978, 2147483648
      %v1116 = vxor.u32 %v981, 2147483648
      %v1117 = vxor.u32 %v983, 2147483648
      %v1118 = vxor.u32 %v986, 2147483648
      %v1119 = vxor.u32 %v988, 2147483648
      %v1120 = vxor.u32 %v991, 2147483648
      %v1121 = vxor.u32 %v993, 2147483648
      %v1122 = vxor.u32 %v996, 2147483648
      %v1123 = vxor.u32 %v998, 2147483648
      %v1124 = vxor.u32 %v1001, 2147483648
      %v1125 = vxor.u32 %v1003, 2147483648
      %v1126 = vxor.u32 %v1006, 2147483648
      %v1127 = vxor.u32 %v1008, 2147483648
      %v1128 = vxor.u32 %v1011, 2147483648
      %v1129 = vxor.u32 %v1013, 2147483648
      %v1130 = vxor.u32 %v1016, 2147483648
      %v1131 = vxor.u32 %v1018, 2147483648
      %v1132 = vxor.u32 %v1021, 2147483648
      %v1133 = vxor.u32 %v1023, 2147483648
      %v1134 = vxor.u32 %v1026, 2147483648
      %v1135 = vxor.u32 %v1028, 2147483648
      %v1136 = vxor.u32 %v1031, 2147483648
      %v1137 = vxor.u32 %v1033, 2147483648
      %v1138 = vxor.u32 %v1036, 2147483648
      %v1139 = vxor.u32 %v1038, 2147483648
      %v1140 = vxor.u32 %v1041, 2147483648
      %v1141 = vxor.u32 %v1043, 2147483648
      %v1142 = vxor.u32 %v1046, 2147483648
      %v1143 = vxor.u32 %v1048, 2147483648
      %v1144 = vxor.u32 %v1051, 2147483648
      %v1145 = vxor.u32 %v1053, 2147483648
      %v1146 = vxor.u32 %v1056, 2147483648
      %v1147 = vxor.u32 %v1058, 2147483648
      %v1148 = vxor.u32 %v1061, 2147483648
      %v1149 = vxor.u32 %v1063, 2147483648
      %v1150 = vxor.u32 %v1066, 2147483648
      %v1151 = vxor.u32 %v1068, 2147483648
      %v1152 = vxor.u32 %v1071, 2147483648
      %v1153 = vxor.u32 %v1073, 2147483648
      %v1154 = vxor.u32 %v1076, 2147483648
      %v1155 = vxor.u32 %v1078, 2147483648
      %v1156 = vxor.u32 %v1081, 2147483648
      %v1157 = vxor.u32 %v1083, 2147483648
      %v1158 = vxor.u32 %v1086, 2147483648
      %v1159 = vxor.u32 %v1088, 2147483648
      %v1160 = vxor.u32 %v1091, 2147483648
      %v1161 = vxor.u32 %v1093, 2147483648
      %v1162 = vxor.u32 %v1096, 2147483648
      %v1163 = vxor.u32 %v1098, 2147483648
      %v1164 = vmul.f32 %v1100, 1.442695
      %v1165 = vpow.pop %v1164
      %v1166 = vmul.f32 %v1101, 1.442695
      %v1167 = vpow.pop %v1166
      %v1168 = vmul.f32 %v1102, 1.442695
      %v1169 = vpow.pop %v1168
      %v1170 = vmul.f32 %v1103, 1.442695
      %v1171 = vpow.pop %v1170
      %v1172 = vmul.f32 %v1104, 1.442695
      %v1173 = vpow.pop %v1172
      %v1174 = vmul.f32 %v1105, 1.442695
      %v1175 = vpow.pop %v1174
      %v1176 = vmul.f32 %v1106, 1.442695
      %v1177 = vpow.pop %v1176
      %v1178 = vmul.f32 %v1107, 1.442695
      %v1179 = vpow.pop %v1178
      %v1180 = vmul.f32 %v1108, 1.442695
      %v1181 = vpow.pop %v1180
      %v1182 = vmul.f32 %v1109, 1.442695
      %v1183 = vpow.pop %v1182
      %v1184 = vmul.f32 %v1110, 1.442695
      %v1185 = vpow.pop %v1184
      %v1186 = vmul.f32 %v1111, 1.442695
      %v1187 = vpow.pop %v1186
      %v1188 = vmul.f32 %v1112, 1.442695
      %v1189 = vpow.pop %v1188
      %v1190 = vmul.f32 %v1113, 1.442695
      %v1191 = vpow.pop %v1190
      %v1192 = vmul.f32 %v1114, 1.442695
      %v1193 = vpow.pop %v1192
      %v1194 = vmul.f32 %v1115, 1.442695
      %v1195 = vpow.pop %v1194
      %v1196 = vmul.f32 %v1116, 1.442695
      %v1197 = vpow.pop %v1196
      %v1198 = vmul.f32 %v1117, 1.442695
      %v1199 = vpow.pop %v1198
      %v1200 = vmul.f32 %v1118, 1.442695
      %v1201 = vpow.pop %v1200
      %v1202 = vmul.f32 %v1119, 1.442695
      %v1203 = vpow.pop %v1202
      %v1204 = vmul.f32 %v1120, 1.442695
      %v1205 = vpow.pop %v1204
      %v1206 = vmul.f32 %v1121, 1.442695
      %v1207 = vpow.pop %v1206
      %v1208 = vmul.f32 %v1122, 1.442695
      %v1209 = vpow.pop %v1208
      %v1210 = vmul.f32 %v1123, 1.442695
      %v1211 = vpow.pop %v1210
      %v1212 = vmul.f32 %v1124, 1.442695
      %v1213 = vpow.pop %v1212
      %v1214 = vmul.f32 %v1125, 1.442695
      %v1215 = vpow.pop %v1214
      %v1216 = vmul.f32 %v1126, 1.442695
      %v1217 = vpow.pop %v1216
      %v1218 = vmul.f32 %v1127, 1.442695
      %v1219 = vpow.pop %v1218
      %v1220 = vmul.f32 %v1128, 1.442695
      %v1221 = vpow.pop %v1220
      %v1222 = vmul.f32 %v1129, 1.442695
      %v1223 = vpow.pop %v1222
      %v1224 = vmul.f32 %v1130, 1.442695
      %v1225 = vpow.pop %v1224
      %v1226 = vmul.f32 %v1131, 1.442695
      %v1227 = vpow.pop %v1226
      %v1228 = vmul.f32 %v1132, 1.442695
      %v1229 = vpow.pop %v1228
      %v1230 = vmul.f32 %v1133, 1.442695
      %v1231 = vpow.pop %v1230
      %v1232 = vmul.f32 %v1134, 1.442695
      %v1233 = vpow.pop %v1232
      %v1234 = vmul.f32 %v1135, 1.442695
      %v1235 = vpow.pop %v1234
      %v1236 = vmul.f32 %v1136, 1.442695
      %v1237 = vpow.pop %v1236
      %v1238 = vmul.f32 %v1137, 1.442695
      %v1239 = vpow.pop %v1238
      %v1240 = vmul.f32 %v1138, 1.442695
      %v1241 = vpow.pop %v1240
      %v1242 = vmul.f32 %v1139, 1.442695
      %v1243 = vpow.pop %v1242
      %v1244 = vmul.f32 %v1140, 1.442695
      %v1245 = vpow.pop %v1244
      %v1246 = vmul.f32 %v1141, 1.442695
      %v1247 = vpow.pop %v1246
      %v1248 = vmul.f32 %v1142, 1.442695
      %v1249 = vpow.pop %v1248
      %v1250 = vmul.f32 %v1143, 1.442695
      %v1251 = vpow.pop %v1250
      %v1252 = vmul.f32 %v1144, 1.442695
      %v1253 = vpow.pop %v1252
      %v1254 = vmul.f32 %v1145, 1.442695
      %v1255 = vpow.pop %v1254
      %v1256 = vmul.f32 %v1146, 1.442695
      %v1257 = vpow.pop %v1256
      %v1258 = vmul.f32 %v1147, 1.442695
      %v1259 = vpow.pop %v1258
      %v1260 = vmul.f32 %v1148, 1.442695
      %v1261 = vpow.pop %v1260
      %v1262 = vmul.f32 %v1149, 1.442695
      %v1263 = vpow.pop %v1262
      %v1264 = vmul.f32 %v1150, 1.442695
      %v1265 = vpow.pop %v1264
      %v1266 = vmul.f32 %v1151, 1.442695
      %v1267 = vpow.pop %v1266
      %v1268 = vmul.f32 %v1152, 1.442695
      %v1269 = vpow.pop %v1268
      %v1270 = vmul.f32 %v1153, 1.442695
      %v1271 = vpow.pop %v1270
      %v1272 = vmul.f32 %v1154, 1.442695
      %v1273 = vpow.pop %v1272
      %v1274 = vmul.f32 %v1155, 1.442695
      %v1275 = vpow.pop %v1274
      %v1276 = vmul.f32 %v1156, 1.442695
      %v1277 = vpow.pop %v1276
      %v1278 = vmul.f32 %v1157, 1.442695
      %v1279 = vpow.pop %v1278
      %v1280 = vmul.f32 %v1158, 1.442695
      %v1281 = vpow.pop %v1280
      %v1282 = vmul.f32 %v1159, 1.442695
      %v1283 = vpow.pop %v1282
      %v1284 = vmul.f32 %v1160, 1.442695
      %v1285 = vpow.pop %v1284
      %v1286 = vmul.f32 %v1161, 1.442695
      %v1287 = vpow.pop %v1286
      %v1288 = vmul.f32 %v1162, 1.442695
      %v1289 = vpow.pop %v1288
      %v1290 = vmul.f32 %v1163, 1.442695
      %v1291 = vpow.pop %v1290
      %v1292 = vadd.f32 %v1165, 1.0
      %v1293 = vadd.f32 %v1167, 1.0
      %v1294 = vadd.f32 %v1169, 1.0
      %v1295 = vadd.f32 %v1171, 1.0
      %v1296 = vadd.f32 %v1173, 1.0
      %v1297 = vadd.f32 %v1175, 1.0
      %v1298 = vadd.f32 %v1177, 1.0
      %v1299 = vadd.f32 %v1179, 1.0
      %v1300 = vadd.f32 %v1181, 1.0
      %v1301 = vadd.f32 %v1183, 1.0
      %v1302 = vadd.f32 %v1185, 1.0
      %v1303 = vadd.f32 %v1187, 1.0
      %v1304 = vadd.f32 %v1189, 1.0
      %v1305 = vadd.f32 %v1191, 1.0
      %v1306 = vadd.f32 %v1193, 1.0
      %v1307 = vadd.f32 %v1195, 1.0
      %v1308 = vadd.f32 %v1197, 1.0
      %v1309 = vadd.f32 %v1199, 1.0
      %v1310 = vadd.f32 %v1201, 1.0
      %v1311 = vadd.f32 %v1203, 1.0
      %v1312 = vadd.f32 %v1205, 1.0
      %v1313 = vadd.f32 %v1207, 1.0
      %v1314 = vadd.f32 %v1209, 1.0
      %v1315 = vadd.f32 %v1211, 1.0
      %v1316 = vadd.f32 %v1213, 1.0
      %v1317 = vadd.f32 %v1215, 1.0
      %v1318 = vadd.f32 %v1217, 1.0
      %v1319 = vadd.f32 %v1219, 1.0
      %v1320 = vadd.f32 %v1221, 1.0
      %v1321 = vadd.f32 %v1223, 1.0
      %v1322 = vadd.f32 %v1225, 1.0
      %v1323 = vadd.f32 %v1227, 1.0
      %v1324 = vadd.f32 %v1229, 1.0
      %v1325 = vadd.f32 %v1231, 1.0
      %v1326 = vadd.f32 %v1233, 1.0
      %v1327 = vadd.f32 %v1235, 1.0
      %v1328 = vadd.f32 %v1237, 1.0
      %v1329 = vadd.f32 %v1239, 1.0
      %v1330 = vadd.f32 %v1241, 1.0
      %v1331 = vadd.f32 %v1243, 1.0
      %v1332 = vadd.f32 %v1245, 1.0
      %v1333 = vadd.f32 %v1247, 1.0
      %v1334 = vadd.f32 %v1249, 1.0
      %v1335 = vadd.f32 %v1251, 1.0
      %v1336 = vadd.f32 %v1253, 1.0
      %v1337 = vadd.f32 %v1255, 1.0
      %v1338 = vadd.f32 %v1257, 1.0
      %v1339 = vadd.f32 %v1259, 1.0
      %v1340 = vadd.f32 %v1261, 1.0
      %v1341 = vadd.f32 %v1263, 1.0
      %v1342 = vadd.f32 %v1265, 1.0
      %v1343 = vadd.f32 %v1267, 1.0
      %v1344 = vadd.f32 %v1269, 1.0
      %v1345 = vadd.f32 %v1271, 1.0
      %v1346 = vadd.f32 %v1273, 1.0
      %v1347 = vadd.f32 %v1275, 1.0
      %v1348 = vadd.f32 %v1277, 1.0
      %v1349 = vadd.f32 %v1279, 1.0
      %v1350 = vadd.f32 %v1281, 1.0
      %v1351 = vadd.f32 %v1283, 1.0
      %v1352 = vadd.f32 %v1285, 1.0
      %v1353 = vadd.f32 %v1287, 1.0
      %v1354 = vadd.f32 %v1289, 1.0
      %v1355 = vadd.f32 %v1291, 1.0
      %v1356 = vrcp.pop %v1292
      %v1357 = vmul.f32 %v1292, %v1356
      %v1358 = vsub.f32 1.0, %v1357
      %v1359 = vmul.f32 %v1356, %v1358
      %v1360 = vadd.f32 %v1356, %v1359
      %vm1361 = vweird.f32 %v1292
      %vm1362 = vweird.f32 %v1356
      %vm1363 = vmor %vm1361, %vm1362
      %v1364 = vsel %vm1363, %v1356, %v1360
      %v1365 = vand.u32 2147483647, %v1292
      %vm1366 = vcmp.eq.f32.partialorder %v1365, 8.507059e+37
      %v1367 = vand.u32 %v1292, 2147483648
      %v1368 = vor.u32 1.1754944e-38, %v1367
      %v1369 = vsel %vm1366, %v1368, %v1364
      %v1370 = vmul.f32 1.0, %v1369
      %v1371 = vrcp.pop %v1293
      %v1372 = vmul.f32 %v1293, %v1371
      %v1373 = vsub.f32 1.0, %v1372
      %v1374 = vmul.f32 %v1371, %v1373
      %v1375 = vadd.f32 %v1371, %v1374
      %vm1376 = vweird.f32 %v1293
      %vm1377 = vweird.f32 %v1371
      %vm1378 = vmor %vm1376, %vm1377
      %v1379 = vsel %vm1378, %v1371, %v1375
      %v1380 = vand.u32 2147483647, %v1293
      %vm1381 = vcmp.eq.f32.partialorder %v1380, 8.507059e+37
      %v1382 = vand.u32 %v1293, 2147483648
      %v1383 = vor.u32 1.1754944e-38, %v1382
      %v1384 = vsel %vm1381, %v1383, %v1379
      %v1385 = vmul.f32 1.0, %v1384
      %v1386 = vrcp.pop %v1294
      %v1387 = vmul.f32 %v1294, %v1386
      %v1388 = vsub.f32 1.0, %v1387
      %v1389 = vmul.f32 %v1386, %v1388
      %v1390 = vadd.f32 %v1386, %v1389
      %vm1391 = vweird.f32 %v1294
      %vm1392 = vweird.f32 %v1386
      %vm1393 = vmor %vm1391, %vm1392
      %v1394 = vsel %vm1393, %v1386, %v1390
      %v1395 = vand.u32 2147483647, %v1294
      %vm1396 = vcmp.eq.f32.partialorder %v1395, 8.507059e+37
      %v1397 = vand.u32 %v1294, 2147483648
      %v1398 = vor.u32 1.1754944e-38, %v1397
      %v1399 = vsel %vm1396, %v1398, %v1394
      %v1400 = vmul.f32 1.0, %v1399
      %v1401 = vrcp.pop %v1295
      %v1402 = vmul.f32 %v1295, %v1401
      %v1403 = vsub.f32 1.0, %v1402
      %v1404 = vmul.f32 %v1401, %v1403
      %v1405 = vadd.f32 %v1401, %v1404
      %vm1406 = vweird.f32 %v1295
      %vm1407 = vweird.f32 %v1401
      %vm1408 = vmor %vm1406, %vm1407
      %v1409 = vsel %vm1408, %v1401, %v1405
      %v1410 = vand.u32 2147483647, %v1295
      %vm1411 = vcmp.eq.f32.partialorder %v1410, 8.507059e+37
      %v1412 = vand.u32 %v1295, 2147483648
      %v1413 = vor.u32 1.1754944e-38, %v1412
      %v1414 = vsel %vm1411, %v1413, %v1409
      %v1415 = vmul.f32 1.0, %v1414
      %v1416 = vrcp.pop %v1296
      %v1417 = vmul.f32 %v1296, %v1416
      %v1418 = vsub.f32 1.0, %v1417
      %v1419 = vmul.f32 %v1416, %v1418
      %v1420 = vadd.f32 %v1416, %v1419
      %vm1421 = vweird.f32 %v1296
      %vm1422 = vweird.f32 %v1416
      %vm1423 = vmor %vm1421, %vm1422
      %v1424 = vsel %vm1423, %v1416, %v1420
      %v1425 = vand.u32 2147483647, %v1296
      %vm1426 = vcmp.eq.f32.partialorder %v1425, 8.507059e+37
      %v1427 = vand.u32 %v1296, 2147483648
      %v1428 = vor.u32 1.1754944e-38, %v1427
      %v1429 = vsel %vm1426, %v1428, %v1424
      %v1430 = vmul.f32 1.0, %v1429
      %v1431 = vrcp.pop %v1297
      %v1432 = vmul.f32 %v1297, %v1431
      %v1433 = vsub.f32 1.0, %v1432
      %v1434 = vmul.f32 %v1431, %v1433
      %v1435 = vadd.f32 %v1431, %v1434
      %vm1436 = vweird.f32 %v1297
      %vm1437 = vweird.f32 %v1431
      %vm1438 = vmor %vm1436, %vm1437
      %v1439 = vsel %vm1438, %v1431, %v1435
      %v1440 = vand.u32 2147483647, %v1297
      %vm1441 = vcmp.eq.f32.partialorder %v1440, 8.507059e+37
      %v1442 = vand.u32 %v1297, 2147483648
      %v1443 = vor.u32 1.1754944e-38, %v1442
      %v1444 = vsel %vm1441, %v1443, %v1439
      %v1445 = vmul.f32 1.0, %v1444
      %v1446 = vrcp.pop %v1298
      %v1447 = vmul.f32 %v1298, %v1446
      %v1448 = vsub.f32 1.0, %v1447
      %v1449 = vmul.f32 %v1446, %v1448
      %v1450 = vadd.f32 %v1446, %v1449
      %vm1451 = vweird.f32 %v1298
      %vm1452 = vweird.f32 %v1446
      %vm1453 = vmor %vm1451, %vm1452
      %v1454 = vsel %vm1453, %v1446, %v1450
      %v1455 = vand.u32 2147483647, %v1298
      %vm1456 = vcmp.eq.f32.partialorder %v1455, 8.507059e+37
      %v1457 = vand.u32 %v1298, 2147483648
      %v1458 = vor.u32 1.1754944e-38, %v1457
      %v1459 = vsel %vm1456, %v1458, %v1454
      %v1460 = vmul.f32 1.0, %v1459
      %v1461 = vrcp.pop %v1299
      %v1462 = vmul.f32 %v1299, %v1461
      %v1463 = vsub.f32 1.0, %v1462
      %v1464 = vmul.f32 %v1461, %v1463
      %v1465 = vadd.f32 %v1461, %v1464
      %vm1466 = vweird.f32 %v1299
      %vm1467 = vweird.f32 %v1461
      %vm1468 = vmor %vm1466, %vm1467
      %v1469 = vsel %vm1468, %v1461, %v1465
      %v1470 = vand.u32 2147483647, %v1299
      %vm1471 = vcmp.eq.f32.partialorder %v1470, 8.507059e+37
      %v1472 = vand.u32 %v1299, 2147483648
      %v1473 = vor.u32 1.1754944e-38, %v1472
      %v1474 = vsel %vm1471, %v1473, %v1469
      %v1475 = vmul.f32 1.0, %v1474
      %v1476 = vrcp.pop %v1300
      %v1477 = vmul.f32 %v1300, %v1476
      %v1478 = vsub.f32 1.0, %v1477
      %v1479 = vmul.f32 %v1476, %v1478
      %v1480 = vadd.f32 %v1476, %v1479
      %vm1481 = vweird.f32 %v1300
      %vm1482 = vweird.f32 %v1476
      %vm1483 = vmor %vm1481, %vm1482
      %v1484 = vsel %vm1483, %v1476, %v1480
      %v1485 = vand.u32 2147483647, %v1300
      %vm1486 = vcmp.eq.f32.partialorder %v1485, 8.507059e+37
      %v1487 = vand.u32 %v1300, 2147483648
      %v1488 = vor.u32 1.1754944e-38, %v1487
      %v1489 = vsel %vm1486, %v1488, %v1484
      %v1490 = vmul.f32 1.0, %v1489
      %v1491 = vrcp.pop %v1301
      %v1492 = vmul.f32 %v1301, %v1491
      %v1493 = vsub.f32 1.0, %v1492
      %v1494 = vmul.f32 %v1491, %v1493
      %v1495 = vadd.f32 %v1491, %v1494
      %vm1496 = vweird.f32 %v1301
      %vm1497 = vweird.f32 %v1491
      %vm1498 = vmor %vm1496, %vm1497
      %v1499 = vsel %vm1498, %v1491, %v1495
      %v1500 = vand.u32 2147483647, %v1301
      %vm1501 = vcmp.eq.f32.partialorder %v1500, 8.507059e+37
      %v1502 = vand.u32 %v1301, 2147483648
      %v1503 = vor.u32 1.1754944e-38, %v1502
      %v1504 = vsel %vm1501, %v1503, %v1499
      %v1505 = vmul.f32 1.0, %v1504
      %v1506 = vrcp.pop %v1302
      %v1507 = vmul.f32 %v1302, %v1506
      %v1508 = vsub.f32 1.0, %v1507
      %v1509 = vmul.f32 %v1506, %v1508
      %v1510 = vadd.f32 %v1506, %v1509
      %vm1511 = vweird.f32 %v1302
      %vm1512 = vweird.f32 %v1506
      %vm1513 = vmor %vm1511, %vm1512
      %v1514 = vsel %vm1513, %v1506, %v1510
      %v1515 = vand.u32 2147483647, %v1302
      %vm1516 = vcmp.eq.f32.partialorder %v1515, 8.507059e+37
      %v1517 = vand.u32 %v1302, 2147483648
      %v1518 = vor.u32 1.1754944e-38, %v1517
      %v1519 = vsel %vm1516, %v1518, %v1514
      %v1520 = vmul.f32 1.0, %v1519
      %v1521 = vrcp.pop %v1303
      %v1522 = vmul.f32 %v1303, %v1521
      %v1523 = vsub.f32 1.0, %v1522
      %v1524 = vmul.f32 %v1521, %v1523
      %v1525 = vadd.f32 %v1521, %v1524
      %vm1526 = vweird.f32 %v1303
      %vm1527 = vweird.f32 %v1521
      %vm1528 = vmor %vm1526, %vm1527
      %v1529 = vsel %vm1528, %v1521, %v1525
      %v1530 = vand.u32 2147483647, %v1303
      %vm1531 = vcmp.eq.f32.partialorder %v1530, 8.507059e+37
      %v1532 = vand.u32 %v1303, 2147483648
      %v1533 = vor.u32 1.1754944e-38, %v1532
      %v1534 = vsel %vm1531, %v1533, %v1529
      %v1535 = vmul.f32 1.0, %v1534
      %v1536 = vrcp.pop %v1304
      %v1537 = vmul.f32 %v1304, %v1536
      %v1538 = vsub.f32 1.0, %v1537
      %v1539 = vmul.f32 %v1536, %v1538
      %v1540 = vadd.f32 %v1536, %v1539
      %vm1541 = vweird.f32 %v1304
      %vm1542 = vweird.f32 %v1536
      %vm1543 = vmor %vm1541, %vm1542
      %v1544 = vsel %vm1543, %v1536, %v1540
      %v1545 = vand.u32 2147483647, %v1304
      %vm1546 = vcmp.eq.f32.partialorder %v1545, 8.507059e+37
      %v1547 = vand.u32 %v1304, 2147483648
      %v1548 = vor.u32 1.1754944e-38, %v1547
      %v1549 = vsel %vm1546, %v1548, %v1544
      %v1550 = vmul.f32 1.0, %v1549
      %v1551 = vrcp.pop %v1305
      %v1552 = vmul.f32 %v1305, %v1551
      %v1553 = vsub.f32 1.0, %v1552
      %v1554 = vmul.f32 %v1551, %v1553
      %v1555 = vadd.f32 %v1551, %v1554
      %vm1556 = vweird.f32 %v1305
      %vm1557 = vweird.f32 %v1551
      %vm1558 = vmor %vm1556, %vm1557
      %v1559 = vsel %vm1558, %v1551, %v1555
      %v1560 = vand.u32 2147483647, %v1305
      %vm1561 = vcmp.eq.f32.partialorder %v1560, 8.507059e+37
      %v1562 = vand.u32 %v1305, 2147483648
      %v1563 = vor.u32 1.1754944e-38, %v1562
      %v1564 = vsel %vm1561, %v1563, %v1559
      %v1565 = vmul.f32 1.0, %v1564
      %v1566 = vrcp.pop %v1306
      %v1567 = vmul.f32 %v1306, %v1566
      %v1568 = vsub.f32 1.0, %v1567
      %v1569 = vmul.f32 %v1566, %v1568
      %v1570 = vadd.f32 %v1566, %v1569
      %vm1571 = vweird.f32 %v1306
      %vm1572 = vweird.f32 %v1566
      %vm1573 = vmor %vm1571, %vm1572
      %v1574 = vsel %vm1573, %v1566, %v1570
      %v1575 = vand.u32 2147483647, %v1306
      %vm1576 = vcmp.eq.f32.partialorder %v1575, 8.507059e+37
      %v1577 = vand.u32 %v1306, 2147483648
      %v1578 = vor.u32 1.1754944e-38, %v1577
      %v1579 = vsel %vm1576, %v1578, %v1574
      %v1580 = vmul.f32 1.0, %v1579
      %v1581 = vrcp.pop %v1307
      %v1582 = vmul.f32 %v1307, %v1581
      %v1583 = vsub.f32 1.0, %v1582
      %v1584 = vmul.f32 %v1581, %v1583
      %v1585 = vadd.f32 %v1581, %v1584
      %vm1586 = vweird.f32 %v1307
      %vm1587 = vweird.f32 %v1581
      %vm1588 = vmor %vm1586, %vm1587
      %v1589 = vsel %vm1588, %v1581, %v1585
      %v1590 = vand.u32 2147483647, %v1307
      %vm1591 = vcmp.eq.f32.partialorder %v1590, 8.507059e+37
      %v1592 = vand.u32 %v1307, 2147483648
      %v1593 = vor.u32 1.1754944e-38, %v1592
      %v1594 = vsel %vm1591, %v1593, %v1589
      %v1595 = vmul.f32 1.0, %v1594
      %v1596 = vrcp.pop %v1308
      %v1597 = vmul.f32 %v1308, %v1596
      %v1598 = vsub.f32 1.0, %v1597
      %v1599 = vmul.f32 %v1596, %v1598
      %v1600 = vadd.f32 %v1596, %v1599
      %vm1601 = vweird.f32 %v1308
      %vm1602 = vweird.f32 %v1596
      %vm1603 = vmor %vm1601, %vm1602
      %v1604 = vsel %vm1603, %v1596, %v1600
      %v1605 = vand.u32 2147483647, %v1308
      %vm1606 = vcmp.eq.f32.partialorder %v1605, 8.507059e+37
      %v1607 = vand.u32 %v1308, 2147483648
      %v1608 = vor.u32 1.1754944e-38, %v1607
      %v1609 = vsel %vm1606, %v1608, %v1604
      %v1610 = vmul.f32 1.0, %v1609
      %v1611 = vrcp.pop %v1309
      %v1612 = vmul.f32 %v1309, %v1611
      %v1613 = vsub.f32 1.0, %v1612
      %v1614 = vmul.f32 %v1611, %v1613
      %v1615 = vadd.f32 %v1611, %v1614
      %vm1616 = vweird.f32 %v1309
      %vm1617 = vweird.f32 %v1611
      %vm1618 = vmor %vm1616, %vm1617
      %v1619 = vsel %vm1618, %v1611, %v1615
      %v1620 = vand.u32 2147483647, %v1309
      %vm1621 = vcmp.eq.f32.partialorder %v1620, 8.507059e+37
      %v1622 = vand.u32 %v1309, 2147483648
      %v1623 = vor.u32 1.1754944e-38, %v1622
      %v1624 = vsel %vm1621, %v1623, %v1619
      %v1625 = vmul.f32 1.0, %v1624
      %v1626 = vrcp.pop %v1310
      %v1627 = vmul.f32 %v1310, %v1626
      %v1628 = vsub.f32 1.0, %v1627
      %v1629 = vmul.f32 %v1626, %v1628
      %v1630 = vadd.f32 %v1626, %v1629
      %vm1631 = vweird.f32 %v1310
      %vm1632 = vweird.f32 %v1626
      %vm1633 = vmor %vm1631, %vm1632
      %v1634 = vsel %vm1633, %v1626, %v1630
      %v1635 = vand.u32 2147483647, %v1310
      %vm1636 = vcmp.eq.f32.partialorder %v1635, 8.507059e+37
      %v1637 = vand.u32 %v1310, 2147483648
      %v1638 = vor.u32 1.1754944e-38, %v1637
      %v1639 = vsel %vm1636, %v1638, %v1634
      %v1640 = vmul.f32 1.0, %v1639
      %v1641 = vrcp.pop %v1311
      %v1642 = vmul.f32 %v1311, %v1641
      %v1643 = vsub.f32 1.0, %v1642
      %v1644 = vmul.f32 %v1641, %v1643
      %v1645 = vadd.f32 %v1641, %v1644
      %vm1646 = vweird.f32 %v1311
      %vm1647 = vweird.f32 %v1641
      %vm1648 = vmor %vm1646, %vm1647
      %v1649 = vsel %vm1648, %v1641, %v1645
      %v1650 = vand.u32 2147483647, %v1311
      %vm1651 = vcmp.eq.f32.partialorder %v1650, 8.507059e+37
      %v1652 = vand.u32 %v1311, 2147483648
      %v1653 = vor.u32 1.1754944e-38, %v1652
      %v1654 = vsel %vm1651, %v1653, %v1649
      %v1655 = vmul.f32 1.0, %v1654
      %v1656 = vrcp.pop %v1312
      %v1657 = vmul.f32 %v1312, %v1656
      %v1658 = vsub.f32 1.0, %v1657
      %v1659 = vmul.f32 %v1656, %v1658
      %v1660 = vadd.f32 %v1656, %v1659
      %vm1661 = vweird.f32 %v1312
      %vm1662 = vweird.f32 %v1656
      %vm1663 = vmor %vm1661, %vm1662
      %v1664 = vsel %vm1663, %v1656, %v1660
      %v1665 = vand.u32 2147483647, %v1312
      %vm1666 = vcmp.eq.f32.partialorder %v1665, 8.507059e+37
      %v1667 = vand.u32 %v1312, 2147483648
      %v1668 = vor.u32 1.1754944e-38, %v1667
      %v1669 = vsel %vm1666, %v1668, %v1664
      %v1670 = vmul.f32 1.0, %v1669
      %v1671 = vrcp.pop %v1313
      %v1672 = vmul.f32 %v1313, %v1671
      %v1673 = vsub.f32 1.0, %v1672
      %v1674 = vmul.f32 %v1671, %v1673
      %v1675 = vadd.f32 %v1671, %v1674
      %vm1676 = vweird.f32 %v1313
      %vm1677 = vweird.f32 %v1671
      %vm1678 = vmor %vm1676, %vm1677
      %v1679 = vsel %vm1678, %v1671, %v1675
      %v1680 = vand.u32 2147483647, %v1313
      %vm1681 = vcmp.eq.f32.partialorder %v1680, 8.507059e+37
      %v1682 = vand.u32 %v1313, 2147483648
      %v1683 = vor.u32 1.1754944e-38, %v1682
      %v1684 = vsel %vm1681, %v1683, %v1679
      %v1685 = vmul.f32 1.0, %v1684
      %v1686 = vrcp.pop %v1314
      %v1687 = vmul.f32 %v1314, %v1686
      %v1688 = vsub.f32 1.0, %v1687
      %v1689 = vmul.f32 %v1686, %v1688
      %v1690 = vadd.f32 %v1686, %v1689
      %vm1691 = vweird.f32 %v1314
      %vm1692 = vweird.f32 %v1686
      %vm1693 = vmor %vm1691, %vm1692
      %v1694 = vsel %vm1693, %v1686, %v1690
      %v1695 = vand.u32 2147483647, %v1314
      %vm1696 = vcmp.eq.f32.partialorder %v1695, 8.507059e+37
      %v1697 = vand.u32 %v1314, 2147483648
      %v1698 = vor.u32 1.1754944e-38, %v1697
      %v1699 = vsel %vm1696, %v1698, %v1694
      %v1700 = vmul.f32 1.0, %v1699
      %v1701 = vrcp.pop %v1315
      %v1702 = vmul.f32 %v1315, %v1701
      %v1703 = vsub.f32 1.0, %v1702
      %v1704 = vmul.f32 %v1701, %v1703
      %v1705 = vadd.f32 %v1701, %v1704
      %vm1706 = vweird.f32 %v1315
      %vm1707 = vweird.f32 %v1701
      %vm1708 = vmor %vm1706, %vm1707
      %v1709 = vsel %vm1708, %v1701, %v1705
      %v1710 = vand.u32 2147483647, %v1315
      %vm1711 = vcmp.eq.f32.partialorder %v1710, 8.507059e+37
      %v1712 = vand.u32 %v1315, 2147483648
      %v1713 = vor.u32 1.1754944e-38, %v1712
      %v1714 = vsel %vm1711, %v1713, %v1709
      %v1715 = vmul.f32 1.0, %v1714
      %v1716 = vrcp.pop %v1316
      %v1717 = vmul.f32 %v1316, %v1716
      %v1718 = vsub.f32 1.0, %v1717
      %v1719 = vmul.f32 %v1716, %v1718
      %v1720 = vadd.f32 %v1716, %v1719
      %vm1721 = vweird.f32 %v1316
      %vm1722 = vweird.f32 %v1716
      %vm1723 = vmor %vm1721, %vm1722
      %v1724 = vsel %vm1723, %v1716, %v1720
      %v1725 = vand.u32 2147483647, %v1316
      %vm1726 = vcmp.eq.f32.partialorder %v1725, 8.507059e+37
      %v1727 = vand.u32 %v1316, 2147483648
      %v1728 = vor.u32 1.1754944e-38, %v1727
      %v1729 = vsel %vm1726, %v1728, %v1724
      %v1730 = vmul.f32 1.0, %v1729
      %v1731 = vrcp.pop %v1317
      %v1732 = vmul.f32 %v1317, %v1731
      %v1733 = vsub.f32 1.0, %v1732
      %v1734 = vmul.f32 %v1731, %v1733
      %v1735 = vadd.f32 %v1731, %v1734
      %vm1736 = vweird.f32 %v1317
      %vm1737 = vweird.f32 %v1731
      %vm1738 = vmor %vm1736, %vm1737
      %v1739 = vsel %vm1738, %v1731, %v1735
      %v1740 = vand.u32 2147483647, %v1317
      %vm1741 = vcmp.eq.f32.partialorder %v1740, 8.507059e+37
      %v1742 = vand.u32 %v1317, 2147483648
      %v1743 = vor.u32 1.1754944e-38, %v1742
      %v1744 = vsel %vm1741, %v1743, %v1739
      %v1745 = vmul.f32 1.0, %v1744
      %v1746 = vrcp.pop %v1318
      %v1747 = vmul.f32 %v1318, %v1746
      %v1748 = vsub.f32 1.0, %v1747
      %v1749 = vmul.f32 %v1746, %v1748
      %v1750 = vadd.f32 %v1746, %v1749
      %vm1751 = vweird.f32 %v1318
      %vm1752 = vweird.f32 %v1746
      %vm1753 = vmor %vm1751, %vm1752
      %v1754 = vsel %vm1753, %v1746, %v1750
      %v1755 = vand.u32 2147483647, %v1318
      %vm1756 = vcmp.eq.f32.partialorder %v1755, 8.507059e+37
      %v1757 = vand.u32 %v1318, 2147483648
      %v1758 = vor.u32 1.1754944e-38, %v1757
      %v1759 = vsel %vm1756, %v1758, %v1754
      %v1760 = vmul.f32 1.0, %v1759
      %v1761 = vrcp.pop %v1319
      %v1762 = vmul.f32 %v1319, %v1761
      %v1763 = vsub.f32 1.0, %v1762
      %v1764 = vmul.f32 %v1761, %v1763
      %v1765 = vadd.f32 %v1761, %v1764
      %vm1766 = vweird.f32 %v1319
      %vm1767 = vweird.f32 %v1761
      %vm1768 = vmor %vm1766, %vm1767
      %v1769 = vsel %vm1768, %v1761, %v1765
      %v1770 = vand.u32 2147483647, %v1319
      %vm1771 = vcmp.eq.f32.partialorder %v1770, 8.507059e+37
      %v1772 = vand.u32 %v1319, 2147483648
      %v1773 = vor.u32 1.1754944e-38, %v1772
      %v1774 = vsel %vm1771, %v1773, %v1769
      %v1775 = vmul.f32 1.0, %v1774
      %v1776 = vrcp.pop %v1320
      %v1777 = vmul.f32 %v1320, %v1776
      %v1778 = vsub.f32 1.0, %v1777
      %v1779 = vmul.f32 %v1776, %v1778
      %v1780 = vadd.f32 %v1776, %v1779
      %vm1781 = vweird.f32 %v1320
      %vm1782 = vweird.f32 %v1776
      %vm1783 = vmor %vm1781, %vm1782
      %v1784 = vsel %vm1783, %v1776, %v1780
      %v1785 = vand.u32 2147483647, %v1320
      %vm1786 = vcmp.eq.f32.partialorder %v1785, 8.507059e+37
      %v1787 = vand.u32 %v1320, 2147483648
      %v1788 = vor.u32 1.1754944e-38, %v1787
      %v1789 = vsel %vm1786, %v1788, %v1784
      %v1790 = vmul.f32 1.0, %v1789
      %v1791 = vrcp.pop %v1321
      %v1792 = vmul.f32 %v1321, %v1791
      %v1793 = vsub.f32 1.0, %v1792
      %v1794 = vmul.f32 %v1791, %v1793
      %v1795 = vadd.f32 %v1791, %v1794
      %vm1796 = vweird.f32 %v1321
      %vm1797 = vweird.f32 %v1791
      %vm1798 = vmor %vm1796, %vm1797
      %v1799 = vsel %vm1798, %v1791, %v1795
      %v1800 = vand.u32 2147483647, %v1321
      %vm1801 = vcmp.eq.f32.partialorder %v1800, 8.507059e+37
      %v1802 = vand.u32 %v1321, 2147483648
      %v1803 = vor.u32 1.1754944e-38, %v1802
      %v1804 = vsel %vm1801, %v1803, %v1799
      %v1805 = vmul.f32 1.0, %v1804
      %v1806 = vrcp.pop %v1322
      %v1807 = vmul.f32 %v1322, %v1806
      %v1808 = vsub.f32 1.0, %v1807
      %v1809 = vmul.f32 %v1806, %v1808
      %v1810 = vadd.f32 %v1806, %v1809
      %vm1811 = vweird.f32 %v1322
      %vm1812 = vweird.f32 %v1806
      %vm1813 = vmor %vm1811, %vm1812
      %v1814 = vsel %vm1813, %v1806, %v1810
      %v1815 = vand.u32 2147483647, %v1322
      %vm1816 = vcmp.eq.f32.partialorder %v1815, 8.507059e+37
      %v1817 = vand.u32 %v1322, 2147483648
      %v1818 = vor.u32 1.1754944e-38, %v1817
      %v1819 = vsel %vm1816, %v1818, %v1814
      %v1820 = vmul.f32 1.0, %v1819
      %v1821 = vrcp.pop %v1323
      %v1822 = vmul.f32 %v1323, %v1821
      %v1823 = vsub.f32 1.0, %v1822
      %v1824 = vmul.f32 %v1821, %v1823
      %v1825 = vadd.f32 %v1821, %v1824
      %vm1826 = vweird.f32 %v1323
      %vm1827 = vweird.f32 %v1821
      %vm1828 = vmor %vm1826, %vm1827
      %v1829 = vsel %vm1828, %v1821, %v1825
      %v1830 = vand.u32 2147483647, %v1323
      %vm1831 = vcmp.eq.f32.partialorder %v1830, 8.507059e+37
      %v1832 = vand.u32 %v1323, 2147483648
      %v1833 = vor.u32 1.1754944e-38, %v1832
      %v1834 = vsel %vm1831, %v1833, %v1829
      %v1835 = vmul.f32 1.0, %v1834
      %v1836 = vrcp.pop %v1324
      %v1837 = vmul.f32 %v1324, %v1836
      %v1838 = vsub.f32 1.0, %v1837
      %v1839 = vmul.f32 %v1836, %v1838
      %v1840 = vadd.f32 %v1836, %v1839
      %vm1841 = vweird.f32 %v1324
      %vm1842 = vweird.f32 %v1836
      %vm1843 = vmor %vm1841, %vm1842
      %v1844 = vsel %vm1843, %v1836, %v1840
      %v1845 = vand.u32 2147483647, %v1324
      %vm1846 = vcmp.eq.f32.partialorder %v1845, 8.507059e+37
      %v1847 = vand.u32 %v1324, 2147483648
      %v1848 = vor.u32 1.1754944e-38, %v1847
      %v1849 = vsel %vm1846, %v1848, %v1844
      %v1850 = vmul.f32 1.0, %v1849
      %v1851 = vrcp.pop %v1325
      %v1852 = vmul.f32 %v1325, %v1851
      %v1853 = vsub.f32 1.0, %v1852
      %v1854 = vmul.f32 %v1851, %v1853
      %v1855 = vadd.f32 %v1851, %v1854
      %vm1856 = vweird.f32 %v1325
      %vm1857 = vweird.f32 %v1851
      %vm1858 = vmor %vm1856, %vm1857
      %v1859 = vsel %vm1858, %v1851, %v1855
      %v1860 = vand.u32 2147483647, %v1325
      %vm1861 = vcmp.eq.f32.partialorder %v1860, 8.507059e+37
      %v1862 = vand.u32 %v1325, 2147483648
      %v1863 = vor.u32 1.1754944e-38, %v1862
      %v1864 = vsel %vm1861, %v1863, %v1859
      %v1865 = vmul.f32 1.0, %v1864
      %v1866 = vrcp.pop %v1326
      %v1867 = vmul.f32 %v1326, %v1866
      %v1868 = vsub.f32 1.0, %v1867
      %v1869 = vmul.f32 %v1866, %v1868
      %v1870 = vadd.f32 %v1866, %v1869
      %vm1871 = vweird.f32 %v1326
      %vm1872 = vweird.f32 %v1866
      %vm1873 = vmor %vm1871, %vm1872
      %v1874 = vsel %vm1873, %v1866, %v1870
      %v1875 = vand.u32 2147483647, %v1326
      %vm1876 = vcmp.eq.f32.partialorder %v1875, 8.507059e+37
      %v1877 = vand.u32 %v1326, 2147483648
      %v1878 = vor.u32 1.1754944e-38, %v1877
      %v1879 = vsel %vm1876, %v1878, %v1874
      %v1880 = vmul.f32 1.0, %v1879
      %v1881 = vrcp.pop %v1327
      %v1882 = vmul.f32 %v1327, %v1881
      %v1883 = vsub.f32 1.0, %v1882
      %v1884 = vmul.f32 %v1881, %v1883
      %v1885 = vadd.f32 %v1881, %v1884
      %vm1886 = vweird.f32 %v1327
      %vm1887 = vweird.f32 %v1881
      %vm1888 = vmor %vm1886, %vm1887
      %v1889 = vsel %vm1888, %v1881, %v1885
      %v1890 = vand.u32 2147483647, %v1327
      %vm1891 = vcmp.eq.f32.partialorder %v1890, 8.507059e+37
      %v1892 = vand.u32 %v1327, 2147483648
      %v1893 = vor.u32 1.1754944e-38, %v1892
      %v1894 = vsel %vm1891, %v1893, %v1889
      %v1895 = vmul.f32 1.0, %v1894
      %v1896 = vrcp.pop %v1328
      %v1897 = vmul.f32 %v1328, %v1896
      %v1898 = vsub.f32 1.0, %v1897
      %v1899 = vmul.f32 %v1896, %v1898
      %v1900 = vadd.f32 %v1896, %v1899
      %vm1901 = vweird.f32 %v1328
      %vm1902 = vweird.f32 %v1896
      %vm1903 = vmor %vm1901, %vm1902
      %v1904 = vsel %vm1903, %v1896, %v1900
      %v1905 = vand.u32 2147483647, %v1328
      %vm1906 = vcmp.eq.f32.partialorder %v1905, 8.507059e+37
      %v1907 = vand.u32 %v1328, 2147483648
      %v1908 = vor.u32 1.1754944e-38, %v1907
      %v1909 = vsel %vm1906, %v1908, %v1904
      %v1910 = vmul.f32 1.0, %v1909
      %v1911 = vrcp.pop %v1329
      %v1912 = vmul.f32 %v1329, %v1911
      %v1913 = vsub.f32 1.0, %v1912
      %v1914 = vmul.f32 %v1911, %v1913
      %v1915 = vadd.f32 %v1911, %v1914
      %vm1916 = vweird.f32 %v1329
      %vm1917 = vweird.f32 %v1911
      %vm1918 = vmor %vm1916, %vm1917
      %v1919 = vsel %vm1918, %v1911, %v1915
      %v1920 = vand.u32 2147483647, %v1329
      %vm1921 = vcmp.eq.f32.partialorder %v1920, 8.507059e+37
      %v1922 = vand.u32 %v1329, 2147483648
      %v1923 = vor.u32 1.1754944e-38, %v1922
      %v1924 = vsel %vm1921, %v1923, %v1919
      %v1925 = vmul.f32 1.0, %v1924
      %v1926 = vrcp.pop %v1330
      %v1927 = vmul.f32 %v1330, %v1926
      %v1928 = vsub.f32 1.0, %v1927
      %v1929 = vmul.f32 %v1926, %v1928
      %v1930 = vadd.f32 %v1926, %v1929
      %vm1931 = vweird.f32 %v1330
      %vm1932 = vweird.f32 %v1926
      %vm1933 = vmor %vm1931, %vm1932
      %v1934 = vsel %vm1933, %v1926, %v1930
      %v1935 = vand.u32 2147483647, %v1330
      %vm1936 = vcmp.eq.f32.partialorder %v1935, 8.507059e+37
      %v1937 = vand.u32 %v1330, 2147483648
      %v1938 = vor.u32 1.1754944e-38, %v1937
      %v1939 = vsel %vm1936, %v1938, %v1934
      %v1940 = vmul.f32 1.0, %v1939
      %v1941 = vrcp.pop %v1331
      %v1942 = vmul.f32 %v1331, %v1941
      %v1943 = vsub.f32 1.0, %v1942
      %v1944 = vmul.f32 %v1941, %v1943
      %v1945 = vadd.f32 %v1941, %v1944
      %vm1946 = vweird.f32 %v1331
      %vm1947 = vweird.f32 %v1941
      %vm1948 = vmor %vm1946, %vm1947
      %v1949 = vsel %vm1948, %v1941, %v1945
      %v1950 = vand.u32 2147483647, %v1331
      %vm1951 = vcmp.eq.f32.partialorder %v1950, 8.507059e+37
      %v1952 = vand.u32 %v1331, 2147483648
      %v1953 = vor.u32 1.1754944e-38, %v1952
      %v1954 = vsel %vm1951, %v1953, %v1949
      %v1955 = vmul.f32 1.0, %v1954
      %v1956 = vrcp.pop %v1332
      %v1957 = vmul.f32 %v1332, %v1956
      %v1958 = vsub.f32 1.0, %v1957
      %v1959 = vmul.f32 %v1956, %v1958
      %v1960 = vadd.f32 %v1956, %v1959
      %vm1961 = vweird.f32 %v1332
      %vm1962 = vweird.f32 %v1956
      %vm1963 = vmor %vm1961, %vm1962
      %v1964 = vsel %vm1963, %v1956, %v1960
      %v1965 = vand.u32 2147483647, %v1332
      %vm1966 = vcmp.eq.f32.partialorder %v1965, 8.507059e+37
      %v1967 = vand.u32 %v1332, 2147483648
      %v1968 = vor.u32 1.1754944e-38, %v1967
      %v1969 = vsel %vm1966, %v1968, %v1964
      %v1970 = vmul.f32 1.0, %v1969
      %v1971 = vrcp.pop %v1333
      %v1972 = vmul.f32 %v1333, %v1971
      %v1973 = vsub.f32 1.0, %v1972
      %v1974 = vmul.f32 %v1971, %v1973
      %v1975 = vadd.f32 %v1971, %v1974
      %vm1976 = vweird.f32 %v1333
      %vm1977 = vweird.f32 %v1971
      %vm1978 = vmor %vm1976, %vm1977
      %v1979 = vsel %vm1978, %v1971, %v1975
      %v1980 = vand.u32 2147483647, %v1333
      %vm1981 = vcmp.eq.f32.partialorder %v1980, 8.507059e+37
      %v1982 = vand.u32 %v1333, 2147483648
      %v1983 = vor.u32 1.1754944e-38, %v1982
      %v1984 = vsel %vm1981, %v1983, %v1979
      %v1985 = vmul.f32 1.0, %v1984
      %v1986 = vrcp.pop %v1334
      %v1987 = vmul.f32 %v1334, %v1986
      %v1988 = vsub.f32 1.0, %v1987
      %v1989 = vmul.f32 %v1986, %v1988
      %v1990 = vadd.f32 %v1986, %v1989
      %vm1991 = vweird.f32 %v1334
      %vm1992 = vweird.f32 %v1986
      %vm1993 = vmor %vm1991, %vm1992
      %v1994 = vsel %vm1993, %v1986, %v1990
      %v1995 = vand.u32 2147483647, %v1334
      %vm1996 = vcmp.eq.f32.partialorder %v1995, 8.507059e+37
      %v1997 = vand.u32 %v1334, 2147483648
      %v1998 = vor.u32 1.1754944e-38, %v1997
      %v1999 = vsel %vm1996, %v1998, %v1994
      %v2000 = vmul.f32 1.0, %v1999
      %v2001 = vrcp.pop %v1335
      %v2002 = vmul.f32 %v1335, %v2001
      %v2003 = vsub.f32 1.0, %v2002
      %v2004 = vmul.f32 %v2001, %v2003
      %v2005 = vadd.f32 %v2001, %v2004
      %vm2006 = vweird.f32 %v1335
      %vm2007 = vweird.f32 %v2001
      %vm2008 = vmor %vm2006, %vm2007
      %v2009 = vsel %vm2008, %v2001, %v2005
      %v2010 = vand.u32 2147483647, %v1335
      %vm2011 = vcmp.eq.f32.partialorder %v2010, 8.507059e+37
      %v2012 = vand.u32 %v1335, 2147483648
      %v2013 = vor.u32 1.1754944e-38, %v2012
      %v2014 = vsel %vm2011, %v2013, %v2009
      %v2015 = vmul.f32 1.0, %v2014
      %v2016 = vrcp.pop %v1336
      %v2017 = vmul.f32 %v1336, %v2016
      %v2018 = vsub.f32 1.0, %v2017
      %v2019 = vmul.f32 %v2016, %v2018
      %v2020 = vadd.f32 %v2016, %v2019
      %vm2021 = vweird.f32 %v1336
      %vm2022 = vweird.f32 %v2016
      %vm2023 = vmor %vm2021, %vm2022
      %v2024 = vsel %vm2023, %v2016, %v2020
      %v2025 = vand.u32 2147483647, %v1336
      %vm2026 = vcmp.eq.f32.partialorder %v2025, 8.507059e+37
      %v2027 = vand.u32 %v1336, 2147483648
      %v2028 = vor.u32 1.1754944e-38, %v2027
      %v2029 = vsel %vm2026, %v2028, %v2024
      %v2030 = vmul.f32 1.0, %v2029
      %v2031 = vrcp.pop %v1337
      %v2032 = vmul.f32 %v1337, %v2031
      %v2033 = vsub.f32 1.0, %v2032
      %v2034 = vmul.f32 %v2031, %v2033
      %v2035 = vadd.f32 %v2031, %v2034
      %vm2036 = vweird.f32 %v1337
      %vm2037 = vweird.f32 %v2031
      %vm2038 = vmor %vm2036, %vm2037
      %v2039 = vsel %vm2038, %v2031, %v2035
      %v2040 = vand.u32 2147483647, %v1337
      %vm2041 = vcmp.eq.f32.partialorder %v2040, 8.507059e+37
      %v2042 = vand.u32 %v1337, 2147483648
      %v2043 = vor.u32 1.1754944e-38, %v2042
      %v2044 = vsel %vm2041, %v2043, %v2039
      %v2045 = vmul.f32 1.0, %v2044
      %v2046 = vrcp.pop %v1338
      %v2047 = vmul.f32 %v1338, %v2046
      %v2048 = vsub.f32 1.0, %v2047
      %v2049 = vmul.f32 %v2046, %v2048
      %v2050 = vadd.f32 %v2046, %v2049
      %vm2051 = vweird.f32 %v1338
      %vm2052 = vweird.f32 %v2046
      %vm2053 = vmor %vm2051, %vm2052
      %v2054 = vsel %vm2053, %v2046, %v2050
      %v2055 = vand.u32 2147483647, %v1338
      %vm2056 = vcmp.eq.f32.partialorder %v2055, 8.507059e+37
      %v2057 = vand.u32 %v1338, 2147483648
      %v2058 = vor.u32 1.1754944e-38, %v2057
      %v2059 = vsel %vm2056, %v2058, %v2054
      %v2060 = vmul.f32 1.0, %v2059
      %v2061 = vrcp.pop %v1339
      %v2062 = vmul.f32 %v1339, %v2061
      %v2063 = vsub.f32 1.0, %v2062
      %v2064 = vmul.f32 %v2061, %v2063
      %v2065 = vadd.f32 %v2061, %v2064
      %vm2066 = vweird.f32 %v1339
      %vm2067 = vweird.f32 %v2061
      %vm2068 = vmor %vm2066, %vm2067
      %v2069 = vsel %vm2068, %v2061, %v2065
      %v2070 = vand.u32 2147483647, %v1339
      %vm2071 = vcmp.eq.f32.partialorder %v2070, 8.507059e+37
      %v2072 = vand.u32 %v1339, 2147483648
      %v2073 = vor.u32 1.1754944e-38, %v2072
      %v2074 = vsel %vm2071, %v2073, %v2069
      %v2075 = vmul.f32 1.0, %v2074
      %v2076 = vrcp.pop %v1340
      %v2077 = vmul.f32 %v1340, %v2076
      %v2078 = vsub.f32 1.0, %v2077
      %v2079 = vmul.f32 %v2076, %v2078
      %v2080 = vadd.f32 %v2076, %v2079
      %vm2081 = vweird.f32 %v1340
      %vm2082 = vweird.f32 %v2076
      %vm2083 = vmor %vm2081, %vm2082
      %v2084 = vsel %vm2083, %v2076, %v2080
      %v2085 = vand.u32 2147483647, %v1340
      %vm2086 = vcmp.eq.f32.partialorder %v2085, 8.507059e+37
      %v2087 = vand.u32 %v1340, 2147483648
      %v2088 = vor.u32 1.1754944e-38, %v2087
      %v2089 = vsel %vm2086, %v2088, %v2084
      %v2090 = vmul.f32 1.0, %v2089
      %v2091 = vrcp.pop %v1341
      %v2092 = vmul.f32 %v1341, %v2091
      %v2093 = vsub.f32 1.0, %v2092
      %v2094 = vmul.f32 %v2091, %v2093
      %v2095 = vadd.f32 %v2091, %v2094
      %vm2096 = vweird.f32 %v1341
      %vm2097 = vweird.f32 %v2091
      %vm2098 = vmor %vm2096, %vm2097
      %v2099 = vsel %vm2098, %v2091, %v2095
      %v2100 = vand.u32 2147483647, %v1341
      %vm2101 = vcmp.eq.f32.partialorder %v2100, 8.507059e+37
      %v2102 = vand.u32 %v1341, 2147483648
      %v2103 = vor.u32 1.1754944e-38, %v2102
      %v2104 = vsel %vm2101, %v2103, %v2099
      %v2105 = vmul.f32 1.0, %v2104
      %v2106 = vrcp.pop %v1342
      %v2107 = vmul.f32 %v1342, %v2106
      %v2108 = vsub.f32 1.0, %v2107
      %v2109 = vmul.f32 %v2106, %v2108
      %v2110 = vadd.f32 %v2106, %v2109
      %vm2111 = vweird.f32 %v1342
      %vm2112 = vweird.f32 %v2106
      %vm2113 = vmor %vm2111, %vm2112
      %v2114 = vsel %vm2113, %v2106, %v2110
      %v2115 = vand.u32 2147483647, %v1342
      %vm2116 = vcmp.eq.f32.partialorder %v2115, 8.507059e+37
      %v2117 = vand.u32 %v1342, 2147483648
      %v2118 = vor.u32 1.1754944e-38, %v2117
      %v2119 = vsel %vm2116, %v2118, %v2114
      %v2120 = vmul.f32 1.0, %v2119
      %v2121 = vrcp.pop %v1343
      %v2122 = vmul.f32 %v1343, %v2121
      %v2123 = vsub.f32 1.0, %v2122
      %v2124 = vmul.f32 %v2121, %v2123
      %v2125 = vadd.f32 %v2121, %v2124
      %vm2126 = vweird.f32 %v1343
      %vm2127 = vweird.f32 %v2121
      %vm2128 = vmor %vm2126, %vm2127
      %v2129 = vsel %vm2128, %v2121, %v2125
      %v2130 = vand.u32 2147483647, %v1343
      %vm2131 = vcmp.eq.f32.partialorder %v2130, 8.507059e+37
      %v2132 = vand.u32 %v1343, 2147483648
      %v2133 = vor.u32 1.1754944e-38, %v2132
      %v2134 = vsel %vm2131, %v2133, %v2129
      %v2135 = vmul.f32 1.0, %v2134
      %v2136 = vrcp.pop %v1344
      %v2137 = vmul.f32 %v1344, %v2136
      %v2138 = vsub.f32 1.0, %v2137
      %v2139 = vmul.f32 %v2136, %v2138
      %v2140 = vadd.f32 %v2136, %v2139
      %vm2141 = vweird.f32 %v1344
      %vm2142 = vweird.f32 %v2136
      %vm2143 = vmor %vm2141, %vm2142
      %v2144 = vsel %vm2143, %v2136, %v2140
      %v2145 = vand.u32 2147483647, %v1344
      %vm2146 = vcmp.eq.f32.partialorder %v2145, 8.507059e+37
      %v2147 = vand.u32 %v1344, 2147483648
      %v2148 = vor.u32 1.1754944e-38, %v2147
      %v2149 = vsel %vm2146, %v2148, %v2144
      %v2150 = vmul.f32 1.0, %v2149
      %v2151 = vrcp.pop %v1345
      %v2152 = vmul.f32 %v1345, %v2151
      %v2153 = vsub.f32 1.0, %v2152
      %v2154 = vmul.f32 %v2151, %v2153
      %v2155 = vadd.f32 %v2151, %v2154
      %vm2156 = vweird.f32 %v1345
      %vm2157 = vweird.f32 %v2151
      %vm2158 = vmor %vm2156, %vm2157
      %v2159 = vsel %vm2158, %v2151, %v2155
      %v2160 = vand.u32 2147483647, %v1345
      %vm2161 = vcmp.eq.f32.partialorder %v2160, 8.507059e+37
      %v2162 = vand.u32 %v1345, 2147483648
      %v2163 = vor.u32 1.1754944e-38, %v2162
      %v2164 = vsel %vm2161, %v2163, %v2159
      %v2165 = vmul.f32 1.0, %v2164
      %v2166 = vrcp.pop %v1346
      %v2167 = vmul.f32 %v1346, %v2166
      %v2168 = vsub.f32 1.0, %v2167
      %v2169 = vmul.f32 %v2166, %v2168
      %v2170 = vadd.f32 %v2166, %v2169
      %vm2171 = vweird.f32 %v1346
      %vm2172 = vweird.f32 %v2166
      %vm2173 = vmor %vm2171, %vm2172
      %v2174 = vsel %vm2173, %v2166, %v2170
      %v2175 = vand.u32 2147483647, %v1346
      %vm2176 = vcmp.eq.f32.partialorder %v2175, 8.507059e+37
      %v2177 = vand.u32 %v1346, 2147483648
      %v2178 = vor.u32 1.1754944e-38, %v2177
      %v2179 = vsel %vm2176, %v2178, %v2174
      %v2180 = vmul.f32 1.0, %v2179
      %v2181 = vrcp.pop %v1347
      %v2182 = vmul.f32 %v1347, %v2181
      %v2183 = vsub.f32 1.0, %v2182
      %v2184 = vmul.f32 %v2181, %v2183
      %v2185 = vadd.f32 %v2181, %v2184
      %vm2186 = vweird.f32 %v1347
      %vm2187 = vweird.f32 %v2181
      %vm2188 = vmor %vm2186, %vm2187
      %v2189 = vsel %vm2188, %v2181, %v2185
      %v2190 = vand.u32 2147483647, %v1347
      %vm2191 = vcmp.eq.f32.partialorder %v2190, 8.507059e+37
      %v2192 = vand.u32 %v1347, 2147483648
      %v2193 = vor.u32 1.1754944e-38, %v2192
      %v2194 = vsel %vm2191, %v2193, %v2189
      %v2195 = vmul.f32 1.0, %v2194
      %v2196 = vrcp.pop %v1348
      %v2197 = vmul.f32 %v1348, %v2196
      %v2198 = vsub.f32 1.0, %v2197
      %v2199 = vmul.f32 %v2196, %v2198
      %v2200 = vadd.f32 %v2196, %v2199
      %vm2201 = vweird.f32 %v1348
      %vm2202 = vweird.f32 %v2196
      %vm2203 = vmor %vm2201, %vm2202
      %v2204 = vsel %vm2203, %v2196, %v2200
      %v2205 = vand.u32 2147483647, %v1348
      %vm2206 = vcmp.eq.f32.partialorder %v2205, 8.507059e+37
      %v2207 = vand.u32 %v1348, 2147483648
      %v2208 = vor.u32 1.1754944e-38, %v2207
      %v2209 = vsel %vm2206, %v2208, %v2204
      %v2210 = vmul.f32 1.0, %v2209
      %v2211 = vrcp.pop %v1349
      %v2212 = vmul.f32 %v1349, %v2211
      %v2213 = vsub.f32 1.0, %v2212
      %v2214 = vmul.f32 %v2211, %v2213
      %v2215 = vadd.f32 %v2211, %v2214
      %vm2216 = vweird.f32 %v1349
      %vm2217 = vweird.f32 %v2211
      %vm2218 = vmor %vm2216, %vm2217
      %v2219 = vsel %vm2218, %v2211, %v2215
      %v2220 = vand.u32 2147483647, %v1349
      %vm2221 = vcmp.eq.f32.partialorder %v2220, 8.507059e+37
      %v2222 = vand.u32 %v1349, 2147483648
      %v2223 = vor.u32 1.1754944e-38, %v2222
      %v2224 = vsel %vm2221, %v2223, %v2219
      %v2225 = vmul.f32 1.0, %v2224
      %v2226 = vrcp.pop %v1350
      %v2227 = vmul.f32 %v1350, %v2226
      %v2228 = vsub.f32 1.0, %v2227
      %v2229 = vmul.f32 %v2226, %v2228
      %v2230 = vadd.f32 %v2226, %v2229
      %vm2231 = vweird.f32 %v1350
      %vm2232 = vweird.f32 %v2226
      %vm2233 = vmor %vm2231, %vm2232
      %v2234 = vsel %vm2233, %v2226, %v2230
      %v2235 = vand.u32 2147483647, %v1350
      %vm2236 = vcmp.eq.f32.partialorder %v2235, 8.507059e+37
      %v2237 = vand.u32 %v1350, 2147483648
      %v2238 = vor.u32 1.1754944e-38, %v2237
      %v2239 = vsel %vm2236, %v2238, %v2234
      %v2240 = vmul.f32 1.0, %v2239
      %v2241 = vrcp.pop %v1351
      %v2242 = vmul.f32 %v1351, %v2241
      %v2243 = vsub.f32 1.0, %v2242
      %v2244 = vmul.f32 %v2241, %v2243
      %v2245 = vadd.f32 %v2241, %v2244
      %vm2246 = vweird.f32 %v1351
      %vm2247 = vweird.f32 %v2241
      %vm2248 = vmor %vm2246, %vm2247
      %v2249 = vsel %vm2248, %v2241, %v2245
      %v2250 = vand.u32 2147483647, %v1351
      %vm2251 = vcmp.eq.f32.partialorder %v2250, 8.507059e+37
      %v2252 = vand.u32 %v1351, 2147483648
      %v2253 = vor.u32 1.1754944e-38, %v2252
      %v2254 = vsel %vm2251, %v2253, %v2249
      %v2255 = vmul.f32 1.0, %v2254
      %v2256 = vrcp.pop %v1352
      %v2257 = vmul.f32 %v1352, %v2256
      %v2258 = vsub.f32 1.0, %v2257
      %v2259 = vmul.f32 %v2256, %v2258
      %v2260 = vadd.f32 %v2256, %v2259
      %vm2261 = vweird.f32 %v1352
      %vm2262 = vweird.f32 %v2256
      %vm2263 = vmor %vm2261, %vm2262
      %v2264 = vsel %vm2263, %v2256, %v2260
      %v2265 = vand.u32 2147483647, %v1352
      %vm2266 = vcmp.eq.f32.partialorder %v2265, 8.507059e+37
      %v2267 = vand.u32 %v1352, 2147483648
      %v2268 = vor.u32 1.1754944e-38, %v2267
      %v2269 = vsel %vm2266, %v2268, %v2264
      %v2270 = vmul.f32 1.0, %v2269
      %v2271 = vrcp.pop %v1353
      %v2272 = vmul.f32 %v1353, %v2271
      %v2273 = vsub.f32 1.0, %v2272
      %v2274 = vmul.f32 %v2271, %v2273
      %v2275 = vadd.f32 %v2271, %v2274
      %vm2276 = vweird.f32 %v1353
      %vm2277 = vweird.f32 %v2271
      %vm2278 = vmor %vm2276, %vm2277
      %v2279 = vsel %vm2278, %v2271, %v2275
      %v2280 = vand.u32 2147483647, %v1353
      %vm2281 = vcmp.eq.f32.partialorder %v2280, 8.507059e+37
      %v2282 = vand.u32 %v1353, 2147483648
      %v2283 = vor.u32 1.1754944e-38, %v2282
      %v2284 = vsel %vm2281, %v2283, %v2279
      %v2285 = vmul.f32 1.0, %v2284
      %v2286 = vrcp.pop %v1354
      %v2287 = vmul.f32 %v1354, %v2286
      %v2288 = vsub.f32 1.0, %v2287
      %v2289 = vmul.f32 %v2286, %v2288
      %v2290 = vadd.f32 %v2286, %v2289
      %vm2291 = vweird.f32 %v1354
      %vm2292 = vweird.f32 %v2286
      %vm2293 = vmor %vm2291, %vm2292
      %v2294 = vsel %vm2293, %v2286, %v2290
      %v2295 = vand.u32 2147483647, %v1354
      %vm2296 = vcmp.eq.f32.partialorder %v2295, 8.507059e+37
      %v2297 = vand.u32 %v1354, 2147483648
      %v2298 = vor.u32 1.1754944e-38, %v2297
      %v2299 = vsel %vm2296, %v2298, %v2294
      %v2300 = vmul.f32 1.0, %v2299
      %v2301 = vrcp.pop %v1355
      %v2302 = vmul.f32 %v1355, %v2301
      %v2303 = vsub.f32 1.0, %v2302
      %v2304 = vmul.f32 %v2301, %v2303
      %v2305 = vadd.f32 %v2301, %v2304
      %vm2306 = vweird.f32 %v1355
      %vm2307 = vweird.f32 %v2301
      %vm2308 = vmor %vm2306, %vm2307
      %v2309 = vsel %vm2308, %v2301, %v2305
      %v2310 = vand.u32 2147483647, %v1355
      %vm2311 = vcmp.eq.f32.partialorder %v2310, 8.507059e+37
      %v2312 = vand.u32 %v1355, 2147483648
      %v2313 = vor.u32 1.1754944e-38, %v2312
      %v2314 = vsel %vm2311, %v2313, %v2309
      %v2315 = vmul.f32 1.0, %v2314
      %v2316 = vmul.f32 %v941, %v1370
      %v2317 = vmul.f32 %v943, %v1385
      %v2318 = vmul.f32 %v946, %v1400
      %v2319 = vmul.f32 %v948, %v1415
      %v2320 = vmul.f32 %v951, %v1430
      %v2321 = vmul.f32 %v953, %v1445
      %v2322 = vmul.f32 %v956, %v1460
      %v2323 = vmul.f32 %v958, %v1475
      %v2324 = vmul.f32 %v961, %v1490
      %v2325 = vmul.f32 %v963, %v1505
      %v2326 = vmul.f32 %v966, %v1520
      %v2327 = vmul.f32 %v968, %v1535
      %v2328 = vmul.f32 %v971, %v1550
      %v2329 = vmul.f32 %v973, %v1565
      %v2330 = vmul.f32 %v976, %v1580
      %v2331 = vmul.f32 %v978, %v1595
      %v2332 = vmul.f32 %v981, %v1610
      %v2333 = vmul.f32 %v983, %v1625
      %v2334 = vmul.f32 %v986, %v1640
      %v2335 = vmul.f32 %v988, %v1655
      %v2336 = vmul.f32 %v991, %v1670
      %v2337 = vmul.f32 %v993, %v1685
      %v2338 = vmul.f32 %v996, %v1700
      %v2339 = vmul.f32 %v998, %v1715
      %v2340 = vmul.f32 %v1001, %v1730
      %v2341 = vmul.f32 %v1003, %v1745
      %v2342 = vmul.f32 %v1006, %v1760
      %v2343 = vmul.f32 %v1008, %v1775
      %v2344 = vmul.f32 %v1011, %v1790
      %v2345 = vmul.f32 %v1013, %v1805
      %v2346 = vmul.f32 %v1016, %v1820
      %v2347 = vmul.f32 %v1018, %v1835
      %v2348 = vmul.f32 %v1021, %v1850
      %v2349 = vmul.f32 %v1023, %v1865
      %v2350 = vmul.f32 %v1026, %v1880
      %v2351 = vmul.f32 %v1028, %v1895
      %v2352 = vmul.f32 %v1031, %v1910
      %v2353 = vmul.f32 %v1033, %v1925
      %v2354 = vmul.f32 %v1036, %v1940
      %v2355 = vmul.f32 %v1038, %v1955
      %v2356 = vmul.f32 %v1041, %v1970
      %v2357 = vmul.f32 %v1043, %v1985
      %v2358 = vmul.f32 %v1046, %v2000
      %v2359 = vmul.f32 %v1048, %v2015
      %v2360 = vmul.f32 %v1051, %v2030
      %v2361 = vmul.f32 %v1053, %v2045
      %v2362 = vmul.f32 %v1056, %v2060
      %v2363 = vmul.f32 %v1058, %v2075
      %v2364 = vmul.f32 %v1061, %v2090
      %v2365 = vmul.f32 %v1063, %v2105
      %v2366 = vmul.f32 %v1066, %v2120
      %v2367 = vmul.f32 %v1068, %v2135
      %v2368 = vmul.f32 %v1071, %v2150
      %v2369 = vmul.f32 %v1073, %v2165
      %v2370 = vmul.f32 %v1076, %v2180
      %v2371 = vmul.f32 %v1078, %v2195
      %v2372 = vmul.f32 %v1081, %v2210
      %v2373 = vmul.f32 %v1083, %v2225
      %v2374 = vmul.f32 %v1086, %v2240
      %v2375 = vmul.f32 %v1088, %v2255
      %v2376 = vmul.f32 %v1091, %v2270
      %v2377 = vmul.f32 %v1093, %v2285
      %v2378 = vmul.f32 %v1096, %v2300
      %v2379 = vmul.f32 %v1098, %v2315
      %v2380 = vpack.c.bf16 %v2316, %v2316
      %v2381 = vpack.c.bf16 %v2317, %v2317
      %v2382 = vpack.c.bf16 %v2318, %v2318
      %v2383 = vpack.c.bf16 %v2319, %v2319
      %v2384 = vpack.c.bf16 %v2320, %v2320
      %v2385 = vpack.c.bf16 %v2321, %v2321
      %v2386 = vpack.c.bf16 %v2322, %v2322
      %v2387 = vpack.c.bf16 %v2323, %v2323
      %v2388 = vpack.c.bf16 %v2324, %v2324
      %v2389 = vpack.c.bf16 %v2325, %v2325
      %v2390 = vpack.c.bf16 %v2326, %v2326
      %v2391 = vpack.c.bf16 %v2327, %v2327
      %v2392 = vpack.c.bf16 %v2328, %v2328
      %v2393 = vpack.c.bf16 %v2329, %v2329
      %v2394 = vpack.c.bf16 %v2330, %v2330
      %v2395 = vpack.c.bf16 %v2331, %v2331
      %v2396 = vpack.c.bf16 %v2332, %v2332
      %v2397 = vpack.c.bf16 %v2333, %v2333
      %v2398 = vpack.c.bf16 %v2334, %v2334
      %v2399 = vpack.c.bf16 %v2335, %v2335
      %v2400 = vpack.c.bf16 %v2336, %v2336
      %v2401 = vpack.c.bf16 %v2337, %v2337
      %v2402 = vpack.c.bf16 %v2338, %v2338
      %v2403 = vpack.c.bf16 %v2339, %v2339
      %v2404 = vpack.c.bf16 %v2340, %v2340
      %v2405 = vpack.c.bf16 %v2341, %v2341
      %v2406 = vpack.c.bf16 %v2342, %v2342
      %v2407 = vpack.c.bf16 %v2343, %v2343
      %v2408 = vpack.c.bf16 %v2344, %v2344
      %v2409 = vpack.c.bf16 %v2345, %v2345
      %v2410 = vpack.c.bf16 %v2346, %v2346
      %v2411 = vpack.c.bf16 %v2347, %v2347
      %v2412 = vpack.c.bf16 %v2348, %v2348
      %v2413 = vpack.c.bf16 %v2349, %v2349
      %v2414 = vpack.c.bf16 %v2350, %v2350
      %v2415 = vpack.c.bf16 %v2351, %v2351
      %v2416 = vpack.c.bf16 %v2352, %v2352
      %v2417 = vpack.c.bf16 %v2353, %v2353
      %v2418 = vpack.c.bf16 %v2354, %v2354
      %v2419 = vpack.c.bf16 %v2355, %v2355
      %v2420 = vpack.c.bf16 %v2356, %v2356
      %v2421 = vpack.c.bf16 %v2357, %v2357
      %v2422 = vpack.c.bf16 %v2358, %v2358
      %v2423 = vpack.c.bf16 %v2359, %v2359
      %v2424 = vpack.c.bf16 %v2360, %v2360
      %v2425 = vpack.c.bf16 %v2361, %v2361
      %v2426 = vpack.c.bf16 %v2362, %v2362
      %v2427 = vpack.c.bf16 %v2363, %v2363
      %v2428 = vpack.c.bf16 %v2364, %v2364
      %v2429 = vpack.c.bf16 %v2365, %v2365
      %v2430 = vpack.c.bf16 %v2366, %v2366
      %v2431 = vpack.c.bf16 %v2367, %v2367
      %v2432 = vpack.c.bf16 %v2368, %v2368
      %v2433 = vpack.c.bf16 %v2369, %v2369
      %v2434 = vpack.c.bf16 %v2370, %v2370
      %v2435 = vpack.c.bf16 %v2371, %v2371
      %v2436 = vpack.c.bf16 %v2372, %v2372
      %v2437 = vpack.c.bf16 %v2373, %v2373
      %v2438 = vpack.c.bf16 %v2374, %v2374
      %v2439 = vpack.c.bf16 %v2375, %v2375
      %v2440 = vpack.c.bf16 %v2376, %v2376
      %v2441 = vpack.c.bf16 %v2377, %v2377
      %v2442 = vpack.c.bf16 %v2378, %v2378
      %v2443 = vpack.c.bf16 %v2379, %v2379
      %vm2444 = vcmask 519168
      %2445 = vst.msk [vmem:[%s226] sm:$0xf] %vm2444, %v2380
      %2446 = vst.msk [vmem:[%s226 + $0x4] sm:$0xf] %vm2444, %v2381
      %2447 = vst.msk [vmem:[%s226 + $0x8] sm:$0xf] %vm2444, %v2382
      %2448 = vst.msk [vmem:[%s226 + $0xc] sm:$0xf] %vm2444, %v2383
      %2449 = vst.msk [vmem:[%s226 + $0x10] sm:$0xf] %vm2444, %v2384
      %2450 = vst.msk [vmem:[%s226 + $0x14] sm:$0xf] %vm2444, %v2385
      %2451 = vst.msk [vmem:[%s226 + $0x18] sm:$0xf] %vm2444, %v2386
      %2452 = vst.msk [vmem:[%s226 + $0x1c] sm:$0xf] %vm2444, %v2387
      %2453 = vst.msk [vmem:[%s226 + $0x20] sm:$0xf] %vm2444, %v2388
      %2454 = vst.msk [vmem:[%s226 + $0x24] sm:$0xf] %vm2444, %v2389
      %2455 = vst.msk [vmem:[%s226 + $0x28] sm:$0xf] %vm2444, %v2390
      %2456 = vst.msk [vmem:[%s226 + $0x2c] sm:$0xf] %vm2444, %v2391
      %2457 = vst.msk [vmem:[%s226 + $0x30] sm:$0xf] %vm2444, %v2392
      %2458 = vst.msk [vmem:[%s226 + $0x34] sm:$0xf] %vm2444, %v2393
      %2459 = vst.msk [vmem:[%s226 + $0x38] sm:$0xf] %vm2444, %v2394
      %2460 = vst.msk [vmem:[%s226 + $0x3c] sm:$0xf] %vm2444, %v2395
      %2461 = vst.msk [vmem:[%s226 + $0x40] sm:$0xf] %vm2444, %v2396
      %2462 = vst.msk [vmem:[%s226 + $0x44] sm:$0xf] %vm2444, %v2397
      %2463 = vst.msk [vmem:[%s226 + $0x48] sm:$0xf] %vm2444, %v2398
      %2464 = vst.msk [vmem:[%s226 + $0x4c] sm:$0xf] %vm2444, %v2399
      %2465 = vst.msk [vmem:[%s226 + $0x50] sm:$0xf] %vm2444, %v2400
      %2466 = vst.msk [vmem:[%s226 + $0x54] sm:$0xf] %vm2444, %v2401
      %2467 = vst.msk [vmem:[%s226 + $0x58] sm:$0xf] %vm2444, %v2402
      %2468 = vst.msk [vmem:[%s226 + $0x5c] sm:$0xf] %vm2444, %v2403
      %2469 = vst.msk [vmem:[%s226 + $0x60] sm:$0xf] %vm2444, %v2404
      %2470 = vst.msk [vmem:[%s226 + $0x64] sm:$0xf] %vm2444, %v2405
      %2471 = vst.msk [vmem:[%s226 + $0x68] sm:$0xf] %vm2444, %v2406
      %2472 = vst.msk [vmem:[%s226 + $0x6c] sm:$0xf] %vm2444, %v2407
      %2473 = vst.msk [vmem:[%s226 + $0x70] sm:$0xf] %vm2444, %v2408
      %2474 = vst.msk [vmem:[%s226 + $0x74] sm:$0xf] %vm2444, %v2409
      %2475 = vst.msk [vmem:[%s226 + $0x78] sm:$0xf] %vm2444, %v2410
      %2476 = vst.msk [vmem:[%s226 + $0x7c] sm:$0xf] %vm2444, %v2411
      %2477 = vst.msk [vmem:[%s226 + $0x80] sm:$0xf] %vm2444, %v2412
      %2478 = vst.msk [vmem:[%s226 + $0x84] sm:$0xf] %vm2444, %v2413
      %2479 = vst.msk [vmem:[%s226 + $0x88] sm:$0xf] %vm2444, %v2414
      %2480 = vst.msk [vmem:[%s226 + $0x8c] sm:$0xf] %vm2444, %v2415
      %2481 = vst.msk [vmem:[%s226 + $0x90] sm:$0xf] %vm2444, %v2416
      %2482 = vst.msk [vmem:[%s226 + $0x94] sm:$0xf] %vm2444, %v2417
      %2483 = vst.msk [vmem:[%s226 + $0x98] sm:$0xf] %vm2444, %v2418
      %2484 = vst.msk [vmem:[%s226 + $0x9c] sm:$0xf] %vm2444, %v2419
      %2485 = vst.msk [vmem:[%s226 + $0xa0] sm:$0xf] %vm2444, %v2420
      %2486 = vst.msk [vmem:[%s226 + $0xa4] sm:$0xf] %vm2444, %v2421
      %2487 = vst.msk [vmem:[%s226 + $0xa8] sm:$0xf] %vm2444, %v2422
      %2488 = vst.msk [vmem:[%s226 + $0xac] sm:$0xf] %vm2444, %v2423
      %2489 = vst.msk [vmem:[%s226 + $0xb0] sm:$0xf] %vm2444, %v2424
      %2490 = vst.msk [vmem:[%s226 + $0xb4] sm:$0xf] %vm2444, %v2425
      %2491 = vst.msk [vmem:[%s226 + $0xb8] sm:$0xf] %vm2444, %v2426
      %2492 = vst.msk [vmem:[%s226 + $0xbc] sm:$0xf] %vm2444, %v2427
      %2493 = vst.msk [vmem:[%s226 + $0xc0] sm:$0xf] %vm2444, %v2428
      %2494 = vst.msk [vmem:[%s226 + $0xc4] sm:$0xf] %vm2444, %v2429
      %2495 = vst.msk [vmem:[%s226 + $0xc8] sm:$0xf] %vm2444, %v2430
      %2496 = vst.msk [vmem:[%s226 + $0xcc] sm:$0xf] %vm2444, %v2431
      %2497 = vst.msk [vmem:[%s226 + $0xd0] sm:$0xf] %vm2444, %v2432
      %2498 = vst.msk [vmem:[%s226 + $0xd4] sm:$0xf] %vm2444, %v2433
      %2499 = vst.msk [vmem:[%s226 + $0xd8] sm:$0xf] %vm2444, %v2434
      %2500 = vst.msk [vmem:[%s226 + $0xdc] sm:$0xf] %vm2444, %v2435
      %2501 = vst.msk [vmem:[%s226 + $0xe0] sm:$0xf] %vm2444, %v2436
      %2502 = vst.msk [vmem:[%s226 + $0xe4] sm:$0xf] %vm2444, %v2437
      %2503 = vst.msk [vmem:[%s226 + $0xe8] sm:$0xf] %vm2444, %v2438
      %2504 = vst.msk [vmem:[%s226 + $0xec] sm:$0xf] %vm2444, %v2439
      %2505 = vst.msk [vmem:[%s226 + $0xf0] sm:$0xf] %vm2444, %v2440
      %2506 = vst.msk [vmem:[%s226 + $0xf4] sm:$0xf] %vm2444, %v2441
      %2507 = vst.msk [vmem:[%s226 + $0xf8] sm:$0xf] %vm2444, %v2442
      %2508 = vst.msk [vmem:[%s226 + $0xfc] sm:$0xf] %vm2444, %v2443
      %s2509 = smul.u32 64, %s19
      %p2510 = scmp.lt.s32.totalorder %s2509, 127
      %s2511 = scalar_select %p2510, %s2509, 127
      %p2512 = scmp.lt.s32.totalorder %s18, 0
      %s2513 = scalar_select %p2512, %s18, 0
      %s2514 = sadd.s32 %s2513, %s2511
      %s2515 = smul.addr %s2514, 4
      %s2516 = scalar_lea.vmem %s3, %s2515
      // Predicated region
      $region33: #{tpu_custom_call.1} parent=31 // pred_check
        %p2517 = pneg %p124
      $region34: #{tpu_custom_call.1} parent=31 // pred_check_branch
        %2519 = sbr.rel (%p2517) target = $region36
      $region35: #{tpu_custom_call.1} parent=31 // pred_region
        %s2520 = smul.u32 64, %s19
      $region36: #{tpu_custom_call.1} parent=31 // pred_fallthru
        _
    $region32: #{tpu_custom_call.1} parent=5 // pred_fallthru
      _
    %p2521 = scmp.le.s32.totalorder 2, %s9
    // Predicated region
    $region37: #{tpu_custom_call.1} parent=5 // pred_check
      %p2522 = pneg %p2521
    $region38: #{tpu_custom_call.1} parent=5 // pred_check_branch
      %2524 = sbr.rel (%p2522) target = $region40
    $region39: #{tpu_custom_call.1} parent=5 // pred_region
      %s2525 = ssub.s32 %s9, 2
      // Predicated region
      $region41: #{tpu_custom_call.1} parent=39 // pred_check
        %p2526 = pneg %p130
      $region42: #{tpu_custom_call.1} parent=39 // pred_check_branch
        %2528 = sbr.rel (%p2526) target = $region44
      $region43: #{tpu_custom_call.1} parent=39 // pred_region
        %s2529 = smul.u32 64, %s21
        %p2530 = scmp.lt.s32.totalorder %s2529, 127
        %s2531 = scalar_select %p2530, %s2529, 127
        %p2532 = scmp.lt.s32.totalorder %s20, 0
        %s2533 = scalar_select %p2532, %s20, 0
        %s2534 = sadd.s32 %s2533, %s2531
        %s2535 = smul.addr %s2534, 4
        %s2536 = scalar_lea.vmem %s3, %s2535
      $region44: #{tpu_custom_call.1} parent=39 // pred_fallthru
        _
    $region40: #{tpu_custom_call.1} parent=5 // pred_fallthru
      _
  $region6: #{tpu_custom_call.1} parent=0 // loop_footer
    %s13 = sadd.s32 1, %s9
  $region7: #{tpu_custom_call.1} parent=0 // loop_footer_branch
    %8 = sbr.rel target = $region3
  $region8: #{tpu_custom_call.1} parent=0 // loop_exit
    _

</llo_original>
